<compile_context>
chip_gen: v5e
topology: v5e:2x2
jax: 0.10.0
libtpu: 0.0.40
codegen_flags: <defaults>
</compile_context>

<pallas_src>
import functools
import math

import jax
import jax.numpy as jnp
from jax.experimental import pallas as pl
from jax.experimental.pallas import tpu as pltpu


def _decoder_layer_kernel(
    x_ref, cross_ref,
    wq_ref, bq_ref, wk_ref, bk_ref, wv_ref, bv_ref, wo_ref, bo_ref,
    g2_ref, be2_ref,
    w1_ref, b1_ref, w2_ref, b2_ref,
    g3_ref, be3_ref,
    o_ref,
    heads_ref,          # VMEM scratch: (Lq_tile, D) f32 head-output slab
    *, n_heads, eps):
    x_f32 = x_ref[...].astype(jnp.float32)        # (Lq_tile, D), residual path
    xb = x_ref[...].astype(jnp.bfloat16)          # bf16 matmul operand
    crb = cross_ref[...].astype(jnp.bfloat16)     # (Lkv, D)
    lq, d = x_f32.shape
    dh = d // n_heads
    scale = 1.0 / math.sqrt(dh)

    # --- cross attention: fused QKV projections (bf16 MXU, f32 accumulate) ---
    q = jnp.dot(xb, wq_ref[...], preferred_element_type=jnp.float32) + bq_ref[...]
    k = jnp.dot(crb, wk_ref[...], preferred_element_type=jnp.float32) + bk_ref[...]
    v = jnp.dot(crb, wv_ref[...], preferred_element_type=jnp.float32) + bv_ref[...]

    q = (q * scale).astype(jnp.bfloat16)          # fold 1/sqrt(dh) into Q once
    kT = k.T.astype(jnp.bfloat16)                 # ONE (Lkv,D)->(D,Lkv) transpose
    vb = v.astype(jnp.bfloat16)

    # Per-head softmax attention. Head outputs land in a VMEM slab; the output
    # projection is a single (Lq,D)x(D,D) matmul after the loop (MXU does the
    # accumulation over D, not the VPU).
    for h in range(n_heads):                      # static unroll, n_heads small
        qh = q[:, h * dh:(h + 1) * dh]            # (Lq, dh)  bf16
        khT = kT[h * dh:(h + 1) * dh, :]          # (dh, Lkv) bf16 (sublane slice)
        s = jnp.dot(qh, khT, preferred_element_type=jnp.float32)   # (Lq, Lkv) f32
        s = s - jnp.max(s, axis=-1, keepdims=True)
        p = jnp.exp(s)
        p = p * pl.reciprocal(jnp.sum(p, axis=-1, keepdims=True), approx=True)
        oh = jnp.dot(p.astype(jnp.bfloat16), vb[:, h * dh:(h + 1) * dh],
                     preferred_element_type=jnp.float32)            # (Lq, dh)
        heads_ref[:, h * dh:(h + 1) * dh] = oh

    attn_out = jnp.dot(heads_ref[...].astype(jnp.bfloat16), wo_ref[...],
                       preferred_element_type=jnp.float32) + bo_ref[...]

    # --- residual + LayerNorm (norm2); dropout == identity at inference ---
    x1 = x_f32 + attn_out
    mu = jnp.mean(x1, axis=-1, keepdims=True)
    var = jnp.mean(jnp.square(x1 - mu), axis=-1, keepdims=True)
    x2 = (x1 - mu) * jax.lax.rsqrt(var + eps) * g2_ref[...] + be2_ref[...]

    # --- position-wise FFN: conv1/conv2 with kernel_size=1 == Linear ---
    h1 = jnp.dot(x2.astype(jnp.bfloat16), w1_ref[...],
                 preferred_element_type=jnp.float32) + b1_ref[...]
    h1 = jnp.maximum(h1, 0.0).astype(jnp.bfloat16)          # relu activation
    y = jnp.dot(h1, w2_ref[...], preferred_element_type=jnp.float32) + b2_ref[...]

    # --- residual + LayerNorm (norm3) ---
    z = x2 + y
    mu2 = jnp.mean(z, axis=-1, keepdims=True)
    var2 = jnp.mean(jnp.square(z - mu2), axis=-1, keepdims=True)
    out = (z - mu2) * jax.lax.rsqrt(var2 + eps) * g3_ref[...] + be3_ref[...]
    o_ref[...] = out.astype(o_ref.dtype)


def decoder_layer(x, cross, params, *, n_heads, eps=1e-5, q_block=None):
    """Fused DecoderLayer forward. x: [B, Lq, D], cross: [B, Lkv, D]."""
    B, Lq, D = x.shape
    _, Lkv, _ = cross.shape
    F = params["w1"].shape[-1]
    dh = D // n_heads

    # Layout requirements (lane-dense slabs, sublane-aligned head slices).
    assert D % 128 == 0, "d_model must be a multiple of 128 (lane-dense)"
    assert D % n_heads == 0 and dh % 8 == 0, "head_dim must be a multiple of 8"

    if q_block is None:
        q_block = Lq if Lq <= 512 else 512
    assert Lq % q_block == 0 and (q_block == Lq or q_block % 8 == 0)
    n_q = Lq // q_block

    kernel = functools.partial(_decoder_layer_kernel, n_heads=n_heads, eps=eps)

    # bf16 weight matrices: half the VMEM residency / DMA, full MXU rate.
    bf16 = jnp.bfloat16
    wq = params["wq"].astype(bf16)
    wk = params["wk"].astype(bf16)
    wv = params["wv"].astype(bf16)
    wo = params["wo"].astype(bf16)
    w1 = params["w1"].astype(bf16)
    w2 = params["w2"].astype(bf16)

    def full(shape):  # weight/bias block: whole array, same block every step
        nd = len(shape)
        return pl.BlockSpec(shape, lambda b, qi, _nd=nd: (0,) * _nd)

    grid_spec = pltpu.PrefetchScalarGridSpec(
        num_scalar_prefetch=0,
        grid=(B, n_q),
        in_specs=[
            pl.BlockSpec((None, q_block, D), lambda b, qi: (b, qi, 0)),  # x tile
            pl.BlockSpec((None, Lkv, D), lambda b, qi: (b, 0, 0)),       # cross
            full((D, D)), full((1, D)),    # wq, bq
            full((D, D)), full((1, D)),    # wk, bk
            full((D, D)), full((1, D)),    # wv, bv
            full((D, D)), full((1, D)),    # wo, bo
            full((1, D)), full((1, D)),    # norm2 gamma/beta
            full((D, F)), full((1, F)),    # conv1 (as Linear), bias
            full((F, D)), full((1, D)),    # conv2 (as Linear), bias
            full((1, D)), full((1, D)),    # norm3 gamma/beta
        ],
        out_specs=pl.BlockSpec((None, q_block, D), lambda b, qi: (b, qi, 0)),
        scratch_shapes=[pltpu.VMEM((q_block, D), jnp.float32)],  # head-out slab
    )

    # Advisory cost estimate for XLA's scheduler.
    flops = 2 * B * (
        Lq * D * D                      # Q projection
        + n_q * 2 * Lkv * D * D         # K,V projections (recomputed per q tile)
        + 2 * Lq * Lkv * D              # scores + P@V over all heads
        + Lq * D * D                    # output projection
        + 2 * Lq * D * F)               # FFN
    transcendentals = B * n_heads * Lq * Lkv
    bytes_accessed = (4 * B * Lq * D * 2            # x in + out (f32)
                      + 4 * B * n_q * Lkv * D       # cross (f32)
                      + 2 * (4 * D * D + 2 * D * F) # bf16 weight matrices
                      + 4 * (9 * D + F))            # f32 biases + LN params

    out = pl.pallas_call(
        kernel,
        out_shape=jax.ShapeDtypeStruct((B, Lq, D), x.dtype),
        grid_spec=grid_spec,
        compiler_params=pltpu.CompilerParams(
            dimension_semantics=("parallel", "parallel"),
            vmem_limit_bytes=40 * 1024 * 1024,
        ),
        cost_estimate=pl.CostEstimate(
            flops=flops, transcendentals=transcendentals,
            bytes_accessed=bytes_accessed),
    )(x, cross,
      wq, params["bq"], wk, params["bk"], wv, params["bv"], wo, params["bo"],
      params["g2"], params["be2"],
      w1, params["b1"], w2, params["b2"],
      params["g3"], params["be3"])

    # Match the PyTorch return signature (output, (attn1, attn2)); attn1 is
    # always None in the module, attn2 is None for output_attention=False.
    # TODO(synk): attention-weight output, cross_mask / tau / delta not supported.
    return out, (None, None)


# ----------------------------- pure-JAX reference -----------------------------

def _layer_norm(x, g, b, eps):
    mu = jnp.mean(x, axis=-1, keepdims=True)
    var = jnp.mean(jnp.square(x - mu), axis=-1, keepdims=True)
    return (x - mu) * jax.lax.rsqrt(var + eps) * g + b


def _reference_decoder_layer(x, cross, params, *, n_heads, eps=1e-5,
                             matmul_dtype=jnp.float32):
    """Reference layer; `matmul_dtype` controls matmul operand precision
    (f32 for a pure reference, bf16 to model the kernel's MXU policy)."""
    hp = jax.lax.Precision.HIGHEST
    c = lambda a: a.astype(matmul_dtype)
    B, Lq, D = x.shape
    Lkv = cross.shape[1]
    dh = D // n_heads
    q = jnp.einsum("bld,de->ble", c(x), c(params["wq"]), precision=hp,
                   preferred_element_type=jnp.float32) + params["bq"]
    k = jnp.einsum("bld,de->ble", c(cross), c(params["wk"]), precision=hp,
                   preferred_element_type=jnp.float32) + params["bk"]
    v = jnp.einsum("bld,de->ble", c(cross), c(params["wv"]), precision=hp,
                   preferred_element_type=jnp.float32) + params["bv"]
    q = q.reshape(B, Lq, n_heads, dh)
    k = k.reshape(B, Lkv, n_heads, dh)
    v = v.reshape(B, Lkv, n_heads, dh)
    s = jnp.einsum("bqhd,bkhd->bhqk", c(q), c(k), precision=hp,
                   preferred_element_type=jnp.float32) / math.sqrt(dh)
    p = jax.nn.softmax(s, axis=-1)
    o = jnp.einsum("bhqk,bkhd->bqhd", c(p), c(v), precision=hp,
                   preferred_element_type=jnp.float32).reshape(B, Lq, D)
    o = jnp.einsum("bld,de->ble", c(o), c(params["wo"]), precision=hp,
                   preferred_element_type=jnp.float32) + params["bo"]
    x2 = _layer_norm(x + o, params["g2"], params["be2"], eps)
    h1 = jax.nn.relu(
        jnp.einsum("bld,df->blf", c(x2), c(params["w1"]), precision=hp,
                   preferred_element_type=jnp.float32) + params["b1"])
    y = jnp.einsum("blf,fd->bld", c(h1), c(params["w2"]), precision=hp,
                   preferred_element_type=jnp.float32) + params["b2"]
    return _layer_norm(x2 + y, params["g3"], params["be3"], eps)


if __name__ == "__main__":
    key = jax.random.PRNGKey(0)
    B, Lq, Lkv = 2, 8, 16
    D, F, H = 128, 256, 4   # d_model, d_ff, n_heads (lane-dense multiples of 128)

    keys = jax.random.split(key, 18)

    def w(k, shape, scale):
        return jax.random.normal(k, shape, jnp.float32) * scale

    params = dict(
        wq=w(keys[0], (D, D), D ** -0.5), bq=w(keys[1], (1, D), 0.02),
        wk=w(keys[2], (D, D), D ** -0.5), bk=w(keys[3], (1, D), 0.02),
        wv=w(keys[4], (D, D), D ** -0.5), bv=w(keys[5], (1, D), 0.02),
        wo=w(keys[6], (D, D), D ** -0.5), bo=w(keys[7], (1, D), 0.02),
        g2=1.0 + w(keys[8], (1, D), 0.02), be2=w(keys[9], (1, D), 0.02),
        w1=w(keys[10], (D, F), D ** -0.5), b1=w(keys[11], (1, F), 0.02),
        w2=w(keys[12], (F, D), F ** -0.5), b2=w(keys[13], (1, D), 0.02),
        g3=1.0 + w(keys[14], (1, D), 0.02), be3=w(keys[15], (1, D), 0.02),
    )
    x = jax.random.normal(keys[16], (B, Lq, D), jnp.float32)
    cross = jax.random.normal(keys[17], (B, Lkv, D), jnp.float32)

    out, (attn1, attn2) = decoder_layer(x, cross, params, n_heads=H)
    out = jax.block_until_ready(out)

    # Tight check vs. a reference using the same precision policy (bf16 matmul
    # operands, f32 accumulation), plus a looser sanity check vs. a pure-f32
    # reference.
    ref_mixed = _reference_decoder_layer(x, cross, params, n_heads=H,
                                         matmul_dtype=jnp.bfloat16)
    ref_f32 = _reference_decoder_layer(x, cross, params, n_heads=H,
                                       matmul_dtype=jnp.float32)
    assert out.shape == ref_f32.shape, (out.shape, ref_f32.shape)
    err_mixed = float(jnp.max(jnp.abs(out - ref_mixed)))
    err_f32 = float(jnp.max(jnp.abs(out - ref_f32)))
    assert jnp.allclose(out, ref_mixed, atol=2e-2, rtol=2e-2), \
        f"max abs err vs bf16-operand reference: {err_mixed}"
    assert jnp.allclose(out, ref_f32, atol=1e-1, rtol=1e-1), \
        f"max abs err vs f32 reference: {err_f32}"

    print("KERNEL_OK")
</pallas_src>

<mosaic_0001>
module attributes {stable_mosaic.version = 11 : i64} {
  func.func @_decoder_layer_kernel(%arg0: i32, %arg1: i32, %arg2: memref<1x8x128xf32, #tpu.memory_space<vmem>>, %arg3: memref<1x16x128xf32, #tpu.memory_space<vmem>>, %arg4: memref<128x128xbf16, #tpu.memory_space<vmem>>, %arg5: memref<1x128xf32, #tpu.memory_space<vmem>>, %arg6: memref<128x128xbf16, #tpu.memory_space<vmem>>, %arg7: memref<1x128xf32, #tpu.memory_space<vmem>>, %arg8: memref<128x128xbf16, #tpu.memory_space<vmem>>, %arg9: memref<1x128xf32, #tpu.memory_space<vmem>>, %arg10: memref<128x128xbf16, #tpu.memory_space<vmem>>, %arg11: memref<1x128xf32, #tpu.memory_space<vmem>>, %arg12: memref<1x128xf32, #tpu.memory_space<vmem>>, %arg13: memref<1x128xf32, #tpu.memory_space<vmem>>, %arg14: memref<128x256xbf16, #tpu.memory_space<vmem>>, %arg15: memref<1x256xf32, #tpu.memory_space<vmem>>, %arg16: memref<256x128xbf16, #tpu.memory_space<vmem>>, %arg17: memref<1x128xf32, #tpu.memory_space<vmem>>, %arg18: memref<1x128xf32, #tpu.memory_space<vmem>>, %arg19: memref<1x128xf32, #tpu.memory_space<vmem>>, %arg20: memref<1x8x128xf32, #tpu.memory_space<vmem>>, %arg21: memref<8x128xf32, #tpu.memory_space<vmem>>) attributes {dimension_semantics = [#tpu.dimension_semantics<parallel>, #tpu.dimension_semantics<parallel>], iteration_bounds = array<i64: 2, 1>, scalar_prefetch = 0 : i64, scratch_operands = 1 : i64, tpu.core_type = #tpu.core_type<tc>, window_params = [{transform_indices = @transform_0, window_bounds = array<i64: 1, 8, 128>}, {transform_indices = @transform_1, window_bounds = array<i64: 1, 16, 128>}, {pipeline_mode = #tpu.pipeline_mode<synchronous>, transform_indices = @transform_2, window_bounds = array<i64: 128, 128>}, {pipeline_mode = #tpu.pipeline_mode<synchronous>, transform_indices = @transform_3, window_bounds = array<i64: 1, 128>}, {pipeline_mode = #tpu.pipeline_mode<synchronous>, transform_indices = @transform_4, window_bounds = array<i64: 128, 128>}, {pipeline_mode = #tpu.pipeline_mode<synchronous>, transform_indices = @transform_5, window_bounds = array<i64: 1, 128>}, {pipeline_mode = #tpu.pipeline_mode<synchronous>, transform_indices = @transform_6, window_bounds = array<i64: 128, 128>}, {pipeline_mode = #tpu.pipeline_mode<synchronous>, transform_indices = @transform_7, window_bounds = array<i64: 1, 128>}, {pipeline_mode = #tpu.pipeline_mode<synchronous>, transform_indices = @transform_8, window_bounds = array<i64: 128, 128>}, {pipeline_mode = #tpu.pipeline_mode<synchronous>, transform_indices = @transform_9, window_bounds = array<i64: 1, 128>}, {pipeline_mode = #tpu.pipeline_mode<synchronous>, transform_indices = @transform_10, window_bounds = array<i64: 1, 128>}, {pipeline_mode = #tpu.pipeline_mode<synchronous>, transform_indices = @transform_11, window_bounds = array<i64: 1, 128>}, {pipeline_mode = #tpu.pipeline_mode<synchronous>, transform_indices = @transform_12, window_bounds = array<i64: 128, 256>}, {pipeline_mode = #tpu.pipeline_mode<synchronous>, transform_indices = @transform_13, window_bounds = array<i64: 1, 256>}, {pipeline_mode = #tpu.pipeline_mode<synchronous>, transform_indices = @transform_14, window_bounds = array<i64: 256, 128>}, {pipeline_mode = #tpu.pipeline_mode<synchronous>, transform_indices = @transform_15, window_bounds = array<i64: 1, 128>}, {pipeline_mode = #tpu.pipeline_mode<synchronous>, transform_indices = @transform_16, window_bounds = array<i64: 1, 128>}, {pipeline_mode = #tpu.pipeline_mode<synchronous>, transform_indices = @transform_17, window_bounds = array<i64: 1, 128>}, {transform_indices = @transform_18, window_bounds = array<i64: 1, 8, 128>}]} {
    %c0 = arith.constant 0 : index
    %c0_0 = arith.constant 0 : index
    %c0_1 = arith.constant 0 : index
    %0 = vector.load %arg2[%c0, %c0_0, %c0_1] : memref<1x8x128xf32, #tpu.memory_space<vmem>>, vector<1x8x128xf32>
    %1 = vector.shape_cast %0 : vector<1x8x128xf32> to vector<8x128xf32>
    %c0_2 = arith.constant 0 : index
    %c0_3 = arith.constant 0 : index
    %c0_4 = arith.constant 0 : index
    %2 = vector.load %arg2[%c0_2, %c0_3, %c0_4] : memref<1x8x128xf32, #tpu.memory_space<vmem>>, vector<1x8x128xf32>
    %3 = vector.shape_cast %2 : vector<1x8x128xf32> to vector<8x128xf32>
    %4 = arith.truncf %3 : vector<8x128xf32> to vector<8x128xbf16>
    %c0_5 = arith.constant 0 : index
    %c0_6 = arith.constant 0 : index
    %c0_7 = arith.constant 0 : index
    %5 = vector.load %arg3[%c0_5, %c0_6, %c0_7] : memref<1x16x128xf32, #tpu.memory_space<vmem>>, vector<1x16x128xf32>
    %6 = vector.shape_cast %5 : vector<1x16x128xf32> to vector<16x128xf32>
    %7 = arith.truncf %6 : vector<16x128xf32> to vector<16x128xbf16>
    %c0_8 = arith.constant 0 : index
    %c0_9 = arith.constant 0 : index
    %8 = vector.load %arg4[%c0_8, %c0_9] : memref<128x128xbf16, #tpu.memory_space<vmem>>, vector<128x128xbf16>
    %cst = arith.constant dense<0.000000e+00> : vector<8x128xf32>
    %9 = tpu.matmul %4, %8, %cst {dimension_numbers = #tpu.dot_dimension_numbers<[1], [0], [0], [1], [0, 0, 1, 1], [], []>} : vector<8x128xbf16>, vector<128x128xbf16>, vector<8x128xf32> -> vector<8x128xf32>
    %c0_10 = arith.constant 0 : index
    %c0_11 = arith.constant 0 : index
    %10 = vector.load %arg5[%c0_10, %c0_11] : memref<1x128xf32, #tpu.memory_space<vmem>>, vector<1x128xf32>
    %11 = vector.broadcast %10 : vector<1x128xf32> to vector<8x128xf32>
    %12 = arith.addf %9, %11 : vector<8x128xf32>
    %c0_12 = arith.constant 0 : index
    %c0_13 = arith.constant 0 : index
    %13 = vector.load %arg6[%c0_12, %c0_13] : memref<128x128xbf16, #tpu.memory_space<vmem>>, vector<128x128xbf16>
    %cst_14 = arith.constant dense<0.000000e+00> : vector<16x128xf32>
    %14 = tpu.matmul %7, %13, %cst_14 {dimension_numbers = #tpu.dot_dimension_numbers<[1], [0], [0], [1], [0, 0, 1, 1], [], []>} : vector<16x128xbf16>, vector<128x128xbf16>, vector<16x128xf32> -> vector<16x128xf32>
    %c0_15 = arith.constant 0 : index
    %c0_16 = arith.constant 0 : index
    %15 = vector.load %arg7[%c0_15, %c0_16] : memref<1x128xf32, #tpu.memory_space<vmem>>, vector<1x128xf32>
    %16 = vector.broadcast %15 : vector<1x128xf32> to vector<16x128xf32>
    %17 = arith.addf %14, %16 : vector<16x128xf32>
    %c0_17 = arith.constant 0 : index
    %c0_18 = arith.constant 0 : index
    %18 = vector.load %arg8[%c0_17, %c0_18] : memref<128x128xbf16, #tpu.memory_space<vmem>>, vector<128x128xbf16>
    %cst_19 = arith.constant dense<0.000000e+00> : vector<16x128xf32>
    %19 = tpu.matmul %7, %18, %cst_19 {dimension_numbers = #tpu.dot_dimension_numbers<[1], [0], [0], [1], [0, 0, 1, 1], [], []>} : vector<16x128xbf16>, vector<128x128xbf16>, vector<16x128xf32> -> vector<16x128xf32>
    %c0_20 = arith.constant 0 : index
    %c0_21 = arith.constant 0 : index
    %20 = vector.load %arg9[%c0_20, %c0_21] : memref<1x128xf32, #tpu.memory_space<vmem>>, vector<1x128xf32>
    %21 = vector.broadcast %20 : vector<1x128xf32> to vector<16x128xf32>
    %22 = arith.addf %19, %21 : vector<16x128xf32>
    %cst_22 = arith.constant 0.176776692 : f32
    %23 = vector.broadcast %cst_22 : f32 to vector<8x128xf32>
    %24 = arith.mulf %12, %23 : vector<8x128xf32>
    %25 = arith.truncf %24 : vector<8x128xf32> to vector<8x128xbf16>
    %26 = tpu.transpose %17, [1, 0] : vector<16x128xf32> -> vector<128x16xf32>
    %27 = arith.truncf %26 : vector<128x16xf32> to vector<128x16xbf16>
    %28 = arith.truncf %22 : vector<16x128xf32> to vector<16x128xbf16>
    %29 = vector.extract_strided_slice %25 {offsets = [0, 0], sizes = [8, 32], strides = [1, 1]} : vector<8x128xbf16> to vector<8x32xbf16>
    %30 = vector.extract_strided_slice %27 {offsets = [0, 0], sizes = [32, 16], strides = [1, 1]} : vector<128x16xbf16> to vector<32x16xbf16>
    %cst_23 = arith.constant dense<0.000000e+00> : vector<8x16xf32>
    %31 = tpu.matmul %29, %30, %cst_23 {dimension_numbers = #tpu.dot_dimension_numbers<[1], [0], [0], [1], [0, 0, 1, 1], [], []>} : vector<8x32xbf16>, vector<32x16xbf16>, vector<8x16xf32> -> vector<8x16xf32>
    %cst_24 = arith.constant dense<0xFF800000> : vector<8xf32>
    %32 = vector.multi_reduction <maximumf>, %31, %cst_24 [1] : vector<8x16xf32> to vector<8xf32>
    %33 = vector.shape_cast %32 : vector<8xf32> to vector<8x1xf32>
    %34 = vector.broadcast %33 : vector<8x1xf32> to vector<8x16xf32>
    %35 = arith.subf %31, %34 : vector<8x16xf32>
    %36 = math.exp %35 : vector<8x16xf32>
    %cst_25 = arith.constant dense<0.000000e+00> : vector<8xf32>
    %37 = vector.multi_reduction <add>, %36, %cst_25 [1] : vector<8x16xf32> to vector<8xf32>
    %38 = vector.shape_cast %37 : vector<8xf32> to vector<8x1xf32>
    %39 = tpu.reciprocal %38 {approx = true} : vector<8x1xf32> -> vector<8x1xf32>
    %40 = vector.broadcast %39 : vector<8x1xf32> to vector<8x16xf32>
    %41 = arith.mulf %36, %40 : vector<8x16xf32>
    %42 = arith.truncf %41 : vector<8x16xf32> to vector<8x16xbf16>
    %43 = vector.extract_strided_slice %28 {offsets = [0, 0], sizes = [16, 32], strides = [1, 1]} : vector<16x128xbf16> to vector<16x32xbf16>
    %cst_26 = arith.constant dense<0.000000e+00> : vector<8x32xf32>
    %44 = tpu.matmul %42, %43, %cst_26 {dimension_numbers = #tpu.dot_dimension_numbers<[1], [0], [0], [1], [0, 0, 1, 1], [], []>} : vector<8x16xbf16>, vector<16x32xbf16>, vector<8x32xf32> -> vector<8x32xf32>
    %c0_27 = arith.constant 0 : index
    %c0_28 = arith.constant 0 : index
    %45 = vector.load %arg21[%c0_27, %c0_28] : memref<8x128xf32, #tpu.memory_space<vmem>>, vector<8x32xf32>
    tpu.vector_store %arg21[%c0_27, %c0_28], %44 {strides = array<i32>} : memref<8x128xf32, #tpu.memory_space<vmem>>, vector<8x32xf32>,
    %46 = vector.extract_strided_slice %25 {offsets = [0, 32], sizes = [8, 32], strides = [1, 1]} : vector<8x128xbf16> to vector<8x32xbf16>
    %47 = vector.extract_strided_slice %27 {offsets = [32, 0], sizes = [32, 16], strides = [1, 1]} : vector<128x16xbf16> to vector<32x16xbf16>
    %cst_29 = arith.constant dense<0.000000e+00> : vector<8x16xf32>
    %48 = tpu.matmul %46, %47, %cst_29 {dimension_numbers = #tpu.dot_dimension_numbers<[1], [0], [0], [1], [0, 0, 1, 1], [], []>} : vector<8x32xbf16>, vector<32x16xbf16>, vector<8x16xf32> -> vector<8x16xf32>
    %cst_30 = arith.constant dense<0xFF800000> : vector<8xf32>
    %49 = vector.multi_reduction <maximumf>, %48, %cst_30 [1] : vector<8x16xf32> to vector<8xf32>
    %50 = vector.shape_cast %49 : vector<8xf32> to vector<8x1xf32>
    %51 = vector.broadcast %50 : vector<8x1xf32> to vector<8x16xf32>
    %52 = arith.subf %48, %51 : vector<8x16xf32>
    %53 = math.exp %52 : vector<8x16xf32>
    %cst_31 = arith.constant dense<0.000000e+00> : vector<8xf32>
    %54 = vector.multi_reduction <add>, %53, %cst_31 [1] : vector<8x16xf32> to vector<8xf32>
    %55 = vector.shape_cast %54 : vector<8xf32> to vector<8x1xf32>
    %56 = tpu.reciprocal %55 {approx = true} : vector<8x1xf32> -> vector<8x1xf32>
    %57 = vector.broadcast %56 : vector<8x1xf32> to vector<8x16xf32>
    %58 = arith.mulf %53, %57 : vector<8x16xf32>
    %59 = arith.truncf %58 : vector<8x16xf32> to vector<8x16xbf16>
    %60 = vector.extract_strided_slice %28 {offsets = [0, 32], sizes = [16, 32], strides = [1, 1]} : vector<16x128xbf16> to vector<16x32xbf16>
    %cst_32 = arith.constant dense<0.000000e+00> : vector<8x32xf32>
    %61 = tpu.matmul %59, %60, %cst_32 {dimension_numbers = #tpu.dot_dimension_numbers<[1], [0], [0], [1], [0, 0, 1, 1], [], []>} : vector<8x16xbf16>, vector<16x32xbf16>, vector<8x32xf32> -> vector<8x32xf32>
    %c0_33 = arith.constant 0 : index
    %c32 = arith.constant 32 : index
    %62 = vector.load %arg21[%c0_33, %c32] : memref<8x128xf32, #tpu.memory_space<vmem>>, vector<8x32xf32>
    tpu.vector_store %arg21[%c0_33, %c32], %61 {strides = array<i32>} : memref<8x128xf32, #tpu.memory_space<vmem>>, vector<8x32xf32>,
    %63 = vector.extract_strided_slice %25 {offsets = [0, 64], sizes = [8, 32], strides = [1, 1]} : vector<8x128xbf16> to vector<8x32xbf16>
    %64 = vector.extract_strided_slice %27 {offsets = [64, 0], sizes = [32, 16], strides = [1, 1]} : vector<128x16xbf16> to vector<32x16xbf16>
    %cst_34 = arith.constant dense<0.000000e+00> : vector<8x16xf32>
    %65 = tpu.matmul %63, %64, %cst_34 {dimension_numbers = #tpu.dot_dimension_numbers<[1], [0], [0], [1], [0, 0, 1, 1], [], []>} : vector<8x32xbf16>, vector<32x16xbf16>, vector<8x16xf32> -> vector<8x16xf32>
    %cst_35 = arith.constant dense<0xFF800000> : vector<8xf32>
    %66 = vector.multi_reduction <maximumf>, %65, %cst_35 [1] : vector<8x16xf32> to vector<8xf32>
    %67 = vector.shape_cast %66 : vector<8xf32> to vector<8x1xf32>
    %68 = vector.broadcast %67 : vector<8x1xf32> to vector<8x16xf32>
    %69 = arith.subf %65, %68 : vector<8x16xf32>
    %70 = math.exp %69 : vector<8x16xf32>
    %cst_36 = arith.constant dense<0.000000e+00> : vector<8xf32>
    %71 = vector.multi_reduction <add>, %70, %cst_36 [1] : vector<8x16xf32> to vector<8xf32>
    %72 = vector.shape_cast %71 : vector<8xf32> to vector<8x1xf32>
    %73 = tpu.reciprocal %72 {approx = true} : vector<8x1xf32> -> vector<8x1xf32>
    %74 = vector.broadcast %73 : vector<8x1xf32> to vector<8x16xf32>
    %75 = arith.mulf %70, %74 : vector<8x16xf32>
    %76 = arith.truncf %75 : vector<8x16xf32> to vector<8x16xbf16>
    %77 = vector.extract_strided_slice %28 {offsets = [0, 64], sizes = [16, 32], strides = [1, 1]} : vector<16x128xbf16> to vector<16x32xbf16>
    %cst_37 = arith.constant dense<0.000000e+00> : vector<8x32xf32>
    %78 = tpu.matmul %76, %77, %cst_37 {dimension_numbers = #tpu.dot_dimension_numbers<[1], [0], [0], [1], [0, 0, 1, 1], [], []>} : vector<8x16xbf16>, vector<16x32xbf16>, vector<8x32xf32> -> vector<8x32xf32>
    %c0_38 = arith.constant 0 : index
    %c64 = arith.constant 64 : index
    %79 = vector.load %arg21[%c0_38, %c64] : memref<8x128xf32, #tpu.memory_space<vmem>>, vector<8x32xf32>
    tpu.vector_store %arg21[%c0_38, %c64], %78 {strides = array<i32>} : memref<8x128xf32, #tpu.memory_space<vmem>>, vector<8x32xf32>,
    %80 = vector.extract_strided_slice %25 {offsets = [0, 96], sizes = [8, 32], strides = [1, 1]} : vector<8x128xbf16> to vector<8x32xbf16>
    %81 = vector.extract_strided_slice %27 {offsets = [96, 0], sizes = [32, 16], strides = [1, 1]} : vector<128x16xbf16> to vector<32x16xbf16>
    %cst_39 = arith.constant dense<0.000000e+00> : vector<8x16xf32>
    %82 = tpu.matmul %80, %81, %cst_39 {dimension_numbers = #tpu.dot_dimension_numbers<[1], [0], [0], [1], [0, 0, 1, 1], [], []>} : vector<8x32xbf16>, vector<32x16xbf16>, vector<8x16xf32> -> vector<8x16xf32>
    %cst_40 = arith.constant dense<0xFF800000> : vector<8xf32>
    %83 = vector.multi_reduction <maximumf>, %82, %cst_40 [1] : vector<8x16xf32> to vector<8xf32>
    %84 = vector.shape_cast %83 : vector<8xf32> to vector<8x1xf32>
    %85 = vector.broadcast %84 : vector<8x1xf32> to vector<8x16xf32>
    %86 = arith.subf %82, %85 : vector<8x16xf32>
    %87 = math.exp %86 : vector<8x16xf32>
    %cst_41 = arith.constant dense<0.000000e+00> : vector<8xf32>
    %88 = vector.multi_reduction <add>, %87, %cst_41 [1] : vector<8x16xf32> to vector<8xf32>
    %89 = vector.shape_cast %88 : vector<8xf32> to vector<8x1xf32>
    %90 = tpu.reciprocal %89 {approx = true} : vector<8x1xf32> -> vector<8x1xf32>
    %91 = vector.broadcast %90 : vector<8x1xf32> to vector<8x16xf32>
    %92 = arith.mulf %87, %91 : vector<8x16xf32>
    %93 = arith.truncf %92 : vector<8x16xf32> to vector<8x16xbf16>
    %94 = vector.extract_strided_slice %28 {offsets = [0, 96], sizes = [16, 32], strides = [1, 1]} : vector<16x128xbf16> to vector<16x32xbf16>
    %cst_42 = arith.constant dense<0.000000e+00> : vector<8x32xf32>
    %95 = tpu.matmul %93, %94, %cst_42 {dimension_numbers = #tpu.dot_dimension_numbers<[1], [0], [0], [1], [0, 0, 1, 1], [], []>} : vector<8x16xbf16>, vector<16x32xbf16>, vector<8x32xf32> -> vector<8x32xf32>
    %c0_43 = arith.constant 0 : index
    %c96 = arith.constant 96 : index
    %96 = vector.load %arg21[%c0_43, %c96] : memref<8x128xf32, #tpu.memory_space<vmem>>, vector<8x32xf32>
    tpu.vector_store %arg21[%c0_43, %c96], %95 {strides = array<i32>} : memref<8x128xf32, #tpu.memory_space<vmem>>, vector<8x32xf32>,
    %c0_44 = arith.constant 0 : index
    %c0_45 = arith.constant 0 : index
    %97 = vector.load %arg21[%c0_44, %c0_45] : memref<8x128xf32, #tpu.memory_space<vmem>>, vector<8x128xf32>
    %98 = arith.truncf %97 : vector<8x128xf32> to vector<8x128xbf16>
    %c0_46 = arith.constant 0 : index
    %c0_47 = arith.constant 0 : index
    %99 = vector.load %arg10[%c0_46, %c0_47] : memref<128x128xbf16, #tpu.memory_space<vmem>>, vector<128x128xbf16>
    %cst_48 = arith.constant dense<0.000000e+00> : vector<8x128xf32>
    %100 = tpu.matmul %98, %99, %cst_48 {dimension_numbers = #tpu.dot_dimension_numbers<[1], [0], [0], [1], [0, 0, 1, 1], [], []>} : vector<8x128xbf16>, vector<128x128xbf16>, vector<8x128xf32> -> vector<8x128xf32>
    %c0_49 = arith.constant 0 : index
    %c0_50 = arith.constant 0 : index
    %101 = vector.load %arg11[%c0_49, %c0_50] : memref<1x128xf32, #tpu.memory_space<vmem>>, vector<1x128xf32>
    %102 = vector.broadcast %101 : vector<1x128xf32> to vector<8x128xf32>
    %103 = arith.addf %100, %102 : vector<8x128xf32>
    %104 = arith.addf %1, %103 : vector<8x128xf32>
    %cst_51 = arith.constant dense<0.000000e+00> : vector<8xf32>
    %105 = vector.multi_reduction <add>, %104, %cst_51 [1] : vector<8x128xf32> to vector<8xf32>
    %106 = vector.shape_cast %105 : vector<8xf32> to vector<8x1xf32>
    %cst_52 = arith.constant 1.280000e+02 : f32
    %107 = vector.broadcast %cst_52 : f32 to vector<8x1xf32>
    %108 = arith.divf %106, %107 : vector<8x1xf32>
    %109 = vector.broadcast %108 : vector<8x1xf32> to vector<8x128xf32>
    %110 = arith.subf %104, %109 : vector<8x128xf32>
    %111 = arith.mulf %110, %110 : vector<8x128xf32>
    %cst_53 = arith.constant dense<0.000000e+00> : vector<8xf32>
    %112 = vector.multi_reduction <add>, %111, %cst_53 [1] : vector<8x128xf32> to vector<8xf32>
    %113 = vector.shape_cast %112 : vector<8xf32> to vector<8x1xf32>
    %cst_54 = arith.constant 1.280000e+02 : f32
    %114 = vector.broadcast %cst_54 : f32 to vector<8x1xf32>
    %115 = arith.divf %113, %114 : vector<8x1xf32>
    %116 = vector.broadcast %108 : vector<8x1xf32> to vector<8x128xf32>
    %117 = arith.subf %104, %116 : vector<8x128xf32>
    %cst_55 = arith.constant 9.99999974E-6 : f32
    %118 = vector.broadcast %cst_55 : f32 to vector<8x1xf32>
    %119 = arith.addf %115, %118 : vector<8x1xf32>
    %120 = math.rsqrt %119 : vector<8x1xf32>
    %121 = vector.broadcast %120 : vector<8x1xf32> to vector<8x128xf32>
    %122 = arith.mulf %117, %121 : vector<8x128xf32>
    %c0_56 = arith.constant 0 : index
    %c0_57 = arith.constant 0 : index
    %123 = vector.load %arg12[%c0_56, %c0_57] : memref<1x128xf32, #tpu.memory_space<vmem>>, vector<1x128xf32>
    %124 = vector.broadcast %123 : vector<1x128xf32> to vector<8x128xf32>
    %125 = arith.mulf %122, %124 : vector<8x128xf32>
    %c0_58 = arith.constant 0 : index
    %c0_59 = arith.constant 0 : index
    %126 = vector.load %arg13[%c0_58, %c0_59] : memref<1x128xf32, #tpu.memory_space<vmem>>, vector<1x128xf32>
    %127 = vector.broadcast %126 : vector<1x128xf32> to vector<8x128xf32>
    %128 = arith.addf %125, %127 : vector<8x128xf32>
    %129 = arith.truncf %128 : vector<8x128xf32> to vector<8x128xbf16>
    %c0_60 = arith.constant 0 : index
    %c0_61 = arith.constant 0 : index
    %130 = vector.load %arg14[%c0_60, %c0_61] : memref<128x256xbf16, #tpu.memory_space<vmem>>, vector<128x256xbf16>
    %cst_62 = arith.constant dense<0.000000e+00> : vector<8x256xf32>
    %131 = tpu.matmul %129, %130, %cst_62 {dimension_numbers = #tpu.dot_dimension_numbers<[1], [0], [0], [1], [0, 0, 1, 1], [], []>} : vector<8x128xbf16>, vector<128x256xbf16>, vector<8x256xf32> -> vector<8x256xf32>
    %c0_63 = arith.constant 0 : index
    %c0_64 = arith.constant 0 : index
    %132 = vector.load %arg15[%c0_63, %c0_64] : memref<1x256xf32, #tpu.memory_space<vmem>>, vector<1x256xf32>
    %133 = vector.broadcast %132 : vector<1x256xf32> to vector<8x256xf32>
    %134 = arith.addf %131, %133 : vector<8x256xf32>
    %cst_65 = arith.constant 0.000000e+00 : f32
    %135 = vector.broadcast %cst_65 : f32 to vector<8x256xf32>
    %136 = arith.maximumf %134, %135 : vector<8x256xf32>
    %137 = arith.truncf %136 : vector<8x256xf32> to vector<8x256xbf16>
    %c0_66 = arith.constant 0 : index
    %c0_67 = arith.constant 0 : index
    %138 = vector.load %arg16[%c0_66, %c0_67] : memref<256x128xbf16, #tpu.memory_space<vmem>>, vector<256x128xbf16>
    %cst_68 = arith.constant dense<0.000000e+00> : vector<8x128xf32>
    %139 = tpu.matmul %137, %138, %cst_68 {dimension_numbers = #tpu.dot_dimension_numbers<[1], [0], [0], [1], [0, 0, 1, 1], [], []>} : vector<8x256xbf16>, vector<256x128xbf16>, vector<8x128xf32> -> vector<8x128xf32>
    %c0_69 = arith.constant 0 : index
    %c0_70 = arith.constant 0 : index
    %140 = vector.load %arg17[%c0_69, %c0_70] : memref<1x128xf32, #tpu.memory_space<vmem>>, vector<1x128xf32>
    %141 = vector.broadcast %140 : vector<1x128xf32> to vector<8x128xf32>
    %142 = arith.addf %139, %141 : vector<8x128xf32>
    %143 = arith.addf %128, %142 : vector<8x128xf32>
    %cst_71 = arith.constant dense<0.000000e+00> : vector<8xf32>
    %144 = vector.multi_reduction <add>, %143, %cst_71 [1] : vector<8x128xf32> to vector<8xf32>
    %145 = vector.shape_cast %144 : vector<8xf32> to vector<8x1xf32>
    %cst_72 = arith.constant 1.280000e+02 : f32
    %146 = vector.broadcast %cst_72 : f32 to vector<8x1xf32>
    %147 = arith.divf %145, %146 : vector<8x1xf32>
    %148 = vector.broadcast %147 : vector<8x1xf32> to vector<8x128xf32>
    %149 = arith.subf %143, %148 : vector<8x128xf32>
    %150 = arith.mulf %149, %149 : vector<8x128xf32>
    %cst_73 = arith.constant dense<0.000000e+00> : vector<8xf32>
    %151 = vector.multi_reduction <add>, %150, %cst_73 [1] : vector<8x128xf32> to vector<8xf32>
    %152 = vector.shape_cast %151 : vector<8xf32> to vector<8x1xf32>
    %cst_74 = arith.constant 1.280000e+02 : f32
    %153 = vector.broadcast %cst_74 : f32 to vector<8x1xf32>
    %154 = arith.divf %152, %153 : vector<8x1xf32>
    %155 = vector.broadcast %147 : vector<8x1xf32> to vector<8x128xf32>
    %156 = arith.subf %143, %155 : vector<8x128xf32>
    %cst_75 = arith.constant 9.99999974E-6 : f32
    %157 = vector.broadcast %cst_75 : f32 to vector<8x1xf32>
    %158 = arith.addf %154, %157 : vector<8x1xf32>
    %159 = math.rsqrt %158 : vector<8x1xf32>
    %160 = vector.broadcast %159 : vector<8x1xf32> to vector<8x128xf32>
    %161 = arith.mulf %156, %160 : vector<8x128xf32>
    %c0_76 = arith.constant 0 : index
    %c0_77 = arith.constant 0 : index
    %162 = vector.load %arg18[%c0_76, %c0_77] : memref<1x128xf32, #tpu.memory_space<vmem>>, vector<1x128xf32>
    %163 = vector.broadcast %162 : vector<1x128xf32> to vector<8x128xf32>
    %164 = arith.mulf %161, %163 : vector<8x128xf32>
    %c0_78 = arith.constant 0 : index
    %c0_79 = arith.constant 0 : index
    %165 = vector.load %arg19[%c0_78, %c0_79] : memref<1x128xf32, #tpu.memory_space<vmem>>, vector<1x128xf32>
    %166 = vector.broadcast %165 : vector<1x128xf32> to vector<8x128xf32>
    %167 = arith.addf %164, %166 : vector<8x128xf32>
    %c0_80 = arith.constant 0 : index
    %c0_81 = arith.constant 0 : index
    %c0_82 = arith.constant 0 : index
    %168 = vector.load %arg20[%c0_80, %c0_81, %c0_82] : memref<1x8x128xf32, #tpu.memory_space<vmem>>, vector<1x8x128xf32>
    %169 = vector.shape_cast %168 : vector<1x8x128xf32> to vector<8x128xf32>
    %170 = vector.shape_cast %167 : vector<8x128xf32> to vector<1x8x128xf32>
    tpu.vector_store %arg20[%c0_80, %c0_81, %c0_82], %170 {strides = array<i32>} : memref<1x8x128xf32, #tpu.memory_space<vmem>>, vector<1x8x128xf32>,
    return
  }
  func.func @transform_0(%arg0: i32, %arg1: i32) -> (i32, i32, i32) {
    %c0_i32 = arith.constant 0 : i32
    %c0_i32_0 = arith.constant 0 : i32
    return %arg0, %arg1, %c0_i32 : i32, i32, i32
  }
  func.func @transform_1(%arg0: i32, %arg1: i32) -> (i32, i32, i32) {
    %c0_i32 = arith.constant 0 : i32
    %c0_i32_0 = arith.constant 0 : i32
    %c0_i32_1 = arith.constant 0 : i32
    return %arg0, %c0_i32, %c0_i32_0 : i32, i32, i32
  }
  func.func @transform_2(%arg0: i32, %arg1: i32) -> (i32, i32) {
    %c0_i32 = arith.constant 0 : i32
    %c0_i32_0 = arith.constant 0 : i32
    %c0_i32_1 = arith.constant 0 : i32
    return %c0_i32, %c0_i32_0 : i32, i32
  }
  func.func @transform_3(%arg0: i32, %arg1: i32) -> (i32, i32) {
    %c0_i32 = arith.constant 0 : i32
    %c0_i32_0 = arith.constant 0 : i32
    %c0_i32_1 = arith.constant 0 : i32
    return %c0_i32, %c0_i32_0 : i32, i32
  }
  func.func @transform_4(%arg0: i32, %arg1: i32) -> (i32, i32) {
    %c0_i32 = arith.constant 0 : i32
    %c0_i32_0 = arith.constant 0 : i32
    %c0_i32_1 = arith.constant 0 : i32
    return %c0_i32, %c0_i32_0 : i32, i32
  }
  func.func @transform_5(%arg0: i32, %arg1: i32) -> (i32, i32) {
    %c0_i32 = arith.constant 0 : i32
    %c0_i32_0 = arith.constant 0 : i32
    %c0_i32_1 = arith.constant 0 : i32
    return %c0_i32, %c0_i32_0 : i32, i32
  }
  func.func @transform_6(%arg0: i32, %arg1: i32) -> (i32, i32) {
    %c0_i32 = arith.constant 0 : i32
    %c0_i32_0 = arith.constant 0 : i32
    %c0_i32_1 = arith.constant 0 : i32
    return %c0_i32, %c0_i32_0 : i32, i32
  }
  func.func @transform_7(%arg0: i32, %arg1: i32) -> (i32, i32) {
    %c0_i32 = arith.constant 0 : i32
    %c0_i32_0 = arith.constant 0 : i32
    %c0_i32_1 = arith.constant 0 : i32
    return %c0_i32, %c0_i32_0 : i32, i32
  }
  func.func @transform_8(%arg0: i32, %arg1: i32) -> (i32, i32) {
    %c0_i32 = arith.constant 0 : i32
    %c0_i32_0 = arith.constant 0 : i32
    %c0_i32_1 = arith.constant 0 : i32
    return %c0_i32, %c0_i32_0 : i32, i32
  }
  func.func @transform_9(%arg0: i32, %arg1: i32) -> (i32, i32) {
    %c0_i32 = arith.constant 0 : i32
    %c0_i32_0 = arith.constant 0 : i32
    %c0_i32_1 = arith.constant 0 : i32
    return %c0_i32, %c0_i32_0 : i32, i32
  }
  func.func @transform_10(%arg0: i32, %arg1: i32) -> (i32, i32) {
    %c0_i32 = arith.constant 0 : i32
    %c0_i32_0 = arith.constant 0 : i32
    %c0_i32_1 = arith.constant 0 : i32
    return %c0_i32, %c0_i32_0 : i32, i32
  }
  func.func @transform_11(%arg0: i32, %arg1: i32) -> (i32, i32) {
    %c0_i32 = arith.constant 0 : i32
    %c0_i32_0 = arith.constant 0 : i32
    %c0_i32_1 = arith.constant 0 : i32
    return %c0_i32, %c0_i32_0 : i32, i32
  }
  func.func @transform_12(%arg0: i32, %arg1: i32) -> (i32, i32) {
    %c0_i32 = arith.constant 0 : i32
    %c0_i32_0 = arith.constant 0 : i32
    %c0_i32_1 = arith.constant 0 : i32
    return %c0_i32, %c0_i32_0 : i32, i32
  }
  func.func @transform_13(%arg0: i32, %arg1: i32) -> (i32, i32) {
    %c0_i32 = arith.constant 0 : i32
    %c0_i32_0 = arith.constant 0 : i32
    %c0_i32_1 = arith.constant 0 : i32
    return %c0_i32, %c0_i32_0 : i32, i32
  }
  func.func @transform_14(%arg0: i32, %arg1: i32) -> (i32, i32) {
    %c0_i32 = arith.constant 0 : i32
    %c0_i32_0 = arith.constant 0 : i32
    %c0_i32_1 = arith.constant 0 : i32
    return %c0_i32, %c0_i32_0 : i32, i32
  }
  func.func @transform_15(%arg0: i32, %arg1: i32) -> (i32, i32) {
    %c0_i32 = arith.constant 0 : i32
    %c0_i32_0 = arith.constant 0 : i32
    %c0_i32_1 = arith.constant 0 : i32
    return %c0_i32, %c0_i32_0 : i32, i32
  }
  func.func @transform_16(%arg0: i32, %arg1: i32) -> (i32, i32) {
    %c0_i32 = arith.constant 0 : i32
    %c0_i32_0 = arith.constant 0 : i32
    %c0_i32_1 = arith.constant 0 : i32
    return %c0_i32, %c0_i32_0 : i32, i32
  }
  func.func @transform_17(%arg0: i32, %arg1: i32) -> (i32, i32) {
    %c0_i32 = arith.constant 0 : i32
    %c0_i32_0 = arith.constant 0 : i32
    %c0_i32_1 = arith.constant 0 : i32
    return %c0_i32, %c0_i32_0 : i32, i32
  }
  func.func @transform_18(%arg0: i32, %arg1: i32) -> (i32, i32, i32) {
    %c0_i32 = arith.constant 0 : i32
    %c0_i32_0 = arith.constant 0 : i32
    return %arg0, %arg1, %c0_i32 : i32, i32, i32
  }
}

</mosaic_0001>

<llo_original>
// kernel: tpu_custom_call.1
$region0: #{tpu_custom_call.1}
  #allocation0 [shape = 'u32[]', space=smem, size = 0x4, offset = 0x4, fixed_abs, tag = 'smem constant byte address 0x4 - core index']
  #allocation1 [shape = 'u32[72,128]{1,0:T(1,128)}', space=vmem, size = 0x9000, scoped, tag = 'internal scratch']
  #allocation2 [shape = 'f32[8,128]{1,0:T(8,128)}', space=vmem, size = 0x1000, scoped, tag = 'scratch operand']
  %s0 = inlined_call_operand.hbm [shape: f32[2,8,128], index: 0, kind: input, shape index: {}]
  %s1 = inlined_call_operand.hbm [shape: f32[2,16,128], index: 1, kind: input, shape index: {}]
  %s2 = inlined_call_operand.hbm [shape: bf16[128,128], index: 2, kind: input, shape index: {}]
  %s3 = inlined_call_operand.vmem [shape: f32[1,128], index: 3, kind: input, shape index: {}]
  %s4 = inlined_call_operand.hbm [shape: bf16[128,128], index: 4, kind: input, shape index: {}]
  %s5 = inlined_call_operand.vmem [shape: f32[1,128], index: 5, kind: input, shape index: {}]
  %s6 = inlined_call_operand.hbm [shape: bf16[128,128], index: 6, kind: input, shape index: {}]
  %s7 = inlined_call_operand.vmem [shape: f32[1,128], index: 7, kind: input, shape index: {}]
  %s8 = inlined_call_operand.hbm [shape: bf16[128,128], index: 8, kind: input, shape index: {}]
  %s9 = inlined_call_operand.vmem [shape: f32[1,128], index: 9, kind: input, shape index: {}]
  %s10 = inlined_call_operand.vmem [shape: f32[1,128], index: 10, kind: input, shape index: {}]
  %s11 = inlined_call_operand.vmem [shape: f32[1,128], index: 11, kind: input, shape index: {}]
  %s12 = inlined_call_operand.hbm [shape: bf16[128,256], index: 12, kind: input, shape index: {}]
  %s13 = inlined_call_operand.vmem [shape: f32[1,256], index: 13, kind: input, shape index: {}]
  %s14 = inlined_call_operand.hbm [shape: bf16[256,128], index: 14, kind: input, shape index: {}]
  %s15 = inlined_call_operand.vmem [shape: f32[1,128], index: 15, kind: input, shape index: {}]
  %s16 = inlined_call_operand.vmem [shape: f32[1,128], index: 16, kind: input, shape index: {}]
  %s17 = inlined_call_operand.vmem [shape: f32[1,128], index: 17, kind: input, shape index: {}]
  %s18 = inlined_call_operand.hbm [shape: f32[2,8,128], index: 18, kind: output, shape index: {}]
  %s19 = sld [smem:[#allocation0]]
  $region137: #{tpu_custom_call.1} parent=0
    _
  %s21 = ssub.s32 1, %s19
  %s22 = scalar_select 0, %s21, %s19
  $region1: #{tpu_custom_call.1} parent=0
    #allocation3 [shape = 'u8[8192]{0}', space=vmem, size = 0x2000, scoped, tag = 'input window, operand 0']
    #allocation4 [shape = 's32[2]{0}', space=sflag, size = 0x8, scoped, tag = 'scoped memory for tpu_custom_call.1']
    #allocation5 [shape = 's32[2]{0}', space=sflag, size = 0x8, scoped, tag = 'scoped memory for tpu_custom_call.1']
    #allocation6 [shape = 'u8[16384]{0}', space=vmem, size = 0x4000, scoped, tag = 'input window, operand 1']
    #allocation7 [shape = 's32[2]{0}', space=sflag, size = 0x8, scoped, tag = 'scoped memory for tpu_custom_call.1']
    #allocation8 [shape = 'u8[32768]{0}', space=vmem, size = 0x8000, scoped, tag = 'input window, operand 2, single buffered']
    #allocation9 [shape = 'u8[32768]{0}', space=vmem, size = 0x8000, scoped, tag = 'input window, operand 4, single buffered']
    #allocation10 [shape = 's32[1]{0}', space=sflag, size = 0x4, scoped, tag = 'scoped memory for tpu_custom_call.1']
    #allocation11 [shape = 'u8[32768]{0}', space=vmem, size = 0x8000, scoped, tag = 'input window, operand 6, single buffered']
    #allocation12 [shape = 'u8[32768]{0}', space=vmem, size = 0x8000, scoped, tag = 'input window, operand 8, single buffered']
    #allocation13 [shape = 's32[1]{0}', space=sflag, size = 0x4, scoped, tag = 'scoped memory for tpu_custom_call.1']
    #allocation14 [shape = 'u8[65536]{0}', space=vmem, size = 0x10000, scoped, tag = 'input window, operand 12, single buffered']
    #allocation15 [shape = 'u8[65536]{0}', space=vmem, size = 0x10000, scoped, tag = 'input window, operand 14, single buffered']
    #allocation16 [shape = 's32[1]{0}', space=sflag, size = 0x4, scoped, tag = 'scoped memory for tpu_custom_call.1']
    #allocation17 [shape = 'u8[8192]{0}', space=vmem, size = 0x2000, scoped, tag = 'output window, operand 0']
    %23 = vsyncpa [#allocation4], 0
    %s24 = scalar_lea.sflag [#allocation4], 1
    %25 = vsyncpa %s24, 0
    %26 = vsyncpa [#allocation7], 0
    %s27 = scalar_lea.sflag [#allocation7], 1
    %28 = vsyncpa %s27, 0
    %29 = vsyncpa [#allocation10], 0
    %30 = vsyncpa [#allocation13], 0
    %31 = vsyncpa [#allocation16], 0
    %32 = vsyncpa [#allocation5], 0
    %s33 = scalar_lea.sflag [#allocation5], 1
    %34 = vsyncpa %s33, 0
    loop: start=0, step=1, limit=4
    $region2: #{tpu_custom_call.1} parent=1 // loop_pre_header
      _
    $region3: #{tpu_custom_call.1} parent=1 // loop_header
      %s36 = sphi 0, %s40
      %p37 = scmp.ge.s32.totalorder %s36, 4
      %s43 = sphi 0, %s55
      %s44 = sphi 0, %s51
      %s45 = sphi 0, %s43
      %s46 = sphi 0, %s44
      %s47 = sphi 0, %s45
      %s48 = sphi 0, %s46
      %s60 = sphi 0, %s62
      %s63 = sphi 0, %s60
      %s64 = sphi 0, %s63
      %s80 = sphi 0, %s64
      %s86 = sphi 0, %s88
      %s89 = sphi 0, %s86
      %s90 = sphi 0, %s89
      %s106 = sphi 0, %s90
      %s110 = sphi 0, %s110
      %s112 = sphi 0, %s110
      %s113 = sphi 0, %s112
      %s127 = sphi 0, %s113
      %s131 = sphi 0, %s131
      %s133 = sphi 0, %s131
      %s134 = sphi 0, %s133
      %s148 = sphi 0, %s134
      %s152 = sphi 0, %s152
      %s154 = sphi 0, %s152
      %s155 = sphi 0, %s154
      %s169 = sphi 0, %s155
      %s173 = sphi 0, %s173
      %s175 = sphi 0, %s173
      %s176 = sphi 0, %s175
      %s190 = sphi 0, %s176
      %s194 = sphi 0, %s194
      %s196 = sphi 0, %s194
      %s197 = sphi 0, %s196
      %s211 = sphi 0, %s197
      %s215 = sphi 0, %s215
      %s217 = sphi 0, %s215
      %s218 = sphi 0, %s217
      %s232 = sphi 0, %s218
      %s236 = sphi 0, %s236
      %s238 = sphi 0, %s236
      %s239 = sphi 0, %s238
      %s253 = sphi 0, %s239
      %s257 = sphi 0, %s257
      %s259 = sphi 0, %s257
      %s260 = sphi 0, %s259
      %s274 = sphi 0, %s260
      %s278 = sphi 0, %s278
      %s280 = sphi 0, %s278
      %s281 = sphi 0, %s280
      %s295 = sphi 0, %s281
      %s299 = sphi 0, %s299
      %s301 = sphi 0, %s299
      %s302 = sphi 0, %s301
      %s316 = sphi 0, %s302
      %s320 = sphi 0, %s320
      %s322 = sphi 0, %s320
      %s323 = sphi 0, %s322
      %s337 = sphi 0, %s323
      %s341 = sphi 0, %s341
      %s343 = sphi 0, %s341
      %s344 = sphi 0, %s343
      %s358 = sphi 0, %s344
      %s362 = sphi 0, %s362
      %s364 = sphi 0, %s362
      %s365 = sphi 0, %s364
      %s379 = sphi 0, %s365
      %s383 = sphi 0, %s383
      %s385 = sphi 0, %s383
      %s386 = sphi 0, %s385
      %s400 = sphi 0, %s386
      %s404 = sphi 0, %s404
      %s406 = sphi 0, %s404
      %s407 = sphi 0, %s406
      %s421 = sphi 0, %s407
      %s425 = sphi 0, %s425
      %s427 = sphi 0, %s425
      %s428 = sphi 0, %s427
      %s442 = sphi 0, %s428
      %s450 = sphi 0, %s452
      %s453 = sphi 0, %s450
      %s454 = sphi 0, %s453
      %s470 = sphi 0, %s454
    $region4: #{tpu_custom_call.1} parent=1 // loop_header_branch
      %39 = sbr.rel (%p37) target = $region8
    $region5: #{tpu_custom_call.1} parent=1 // loop_body
      %s41 = ssub.s32 %s36, 1
      %s42 = ssub.s32 %s36, 2
      %s49 = sadd.s32 1, %s44
      %p50 = scmp.ge.s32.totalorder %s49, 1
      %s51 = scalar_select %p50, 0, %s49
      %s52 = sadd.s32 1, %s43
      %s53 = scalar_select %p50, %s52, %s43
      %p54 = scmp.ge.s32.totalorder %s53, 2
      %s55 = scalar_select %p54, 0, %s53
      %s56 = ssub.s32 %s43, %s55
      %s57 = ssub.s32 %s44, %s51
      %s58 = sor.u32 %s56, %s57
      %p59 = scmp.eq.s32.totalorder %s58, 0
      %s61 = sadd.s32 %s60, 1
      %s62 = scalar_select %p59, %s60, %s61
      %p65 = pneg %p59
      %p66 = scmp.eq.s32.totalorder %s36, 1
      %p67 = por %p65, %p66
      %p68 = scmp.ne.s32.totalorder %s60, %s63
      %p69 = scmp.eq.s32.totalorder %s36, 0
      %p70 = por %p68, %p69
      %p71 = scmp.ne.s32.totalorder %s60, %s63
      %p72 = scmp.eq.s32.totalorder %s41, 1
      %p73 = por %p71, %p72
      %p74 = scmp.ne.s32.totalorder %s63, %s64
      %p75 = scmp.eq.s32.totalorder %s41, 0
      %p76 = por %p74, %p75
      %p77 = scmp.ne.s32.totalorder %s63, %s64
      %p78 = scmp.eq.s32.totalorder %s42, 1
      %p79 = por %p77, %p78
      %p81 = scmp.ne.s32.totalorder %s64, %s80
      %p82 = scmp.eq.s32.totalorder %s42, 0
      %p83 = por %p81, %p82
      %s84 = ssub.s32 %s43, %s55
      %p85 = scmp.eq.s32.totalorder %s84, 0
      %s87 = sadd.s32 %s86, 1
      %s88 = scalar_select %p85, %s86, %s87
      %p91 = pneg %p85
      %p92 = scmp.eq.s32.totalorder %s36, 1
      %p93 = por %p91, %p92
      %p94 = scmp.ne.s32.totalorder %s86, %s89
      %p95 = scmp.eq.s32.totalorder %s36, 0
      %p96 = por %p94, %p95
      %p97 = scmp.ne.s32.totalorder %s86, %s89
      %p98 = scmp.eq.s32.totalorder %s41, 1
      %p99 = por %p97, %p98
      %p100 = scmp.ne.s32.totalorder %s89, %s90
      %p101 = scmp.eq.s32.totalorder %s41, 0
      %p102 = por %p100, %p101
      %p103 = scmp.ne.s32.totalorder %s89, %s90
      %p104 = scmp.eq.s32.totalorder %s42, 1
      %p105 = por %p103, %p104
      %p107 = scmp.ne.s32.totalorder %s90, %s106
      %p108 = scmp.eq.s32.totalorder %s42, 0
      %p109 = por %p107, %p108
      %s111 = sadd.s32 %s110, 1
      %p114 = scmp.eq.s32.totalorder %s36, 1
      %p115 = scmp.ne.s32.totalorder %s110, %s112
      %p116 = scmp.eq.s32.totalorder %s36, 0
      %p117 = por %p115, %p116
      %p118 = scmp.ne.s32.totalorder %s110, %s112
      %p119 = scmp.eq.s32.totalorder %s41, 1
      %p120 = por %p118, %p119
      %p121 = scmp.ne.s32.totalorder %s112, %s113
      %p122 = scmp.eq.s32.totalorder %s41, 0
      %p123 = por %p121, %p122
      %p124 = scmp.ne.s32.totalorder %s112, %s113
      %p125 = scmp.eq.s32.totalorder %s42, 1
      %p126 = por %p124, %p125
      %p128 = scmp.ne.s32.totalorder %s113, %s127
      %p129 = scmp.eq.s32.totalorder %s42, 0
      %p130 = por %p128, %p129
      %s132 = sadd.s32 %s131, 1
      %p135 = scmp.eq.s32.totalorder %s36, 1
      %p136 = scmp.ne.s32.totalorder %s131, %s133
      %p137 = scmp.eq.s32.totalorder %s36, 0
      %p138 = por %p136, %p137
      %p139 = scmp.ne.s32.totalorder %s131, %s133
      %p140 = scmp.eq.s32.totalorder %s41, 1
      %p141 = por %p139, %p140
      %p142 = scmp.ne.s32.totalorder %s133, %s134
      %p143 = scmp.eq.s32.totalorder %s41, 0
      %p144 = por %p142, %p143
      %p145 = scmp.ne.s32.totalorder %s133, %s134
      %p146 = scmp.eq.s32.totalorder %s42, 1
      %p147 = por %p145, %p146
      %p149 = scmp.ne.s32.totalorder %s134, %s148
      %p150 = scmp.eq.s32.totalorder %s42, 0
      %p151 = por %p149, %p150
      %s153 = sadd.s32 %s152, 1
      %p156 = scmp.eq.s32.totalorder %s36, 1
      %p157 = scmp.ne.s32.totalorder %s152, %s154
      %p158 = scmp.eq.s32.totalorder %s36, 0
      %p159 = por %p157, %p158
      %p160 = scmp.ne.s32.totalorder %s152, %s154
      %p161 = scmp.eq.s32.totalorder %s41, 1
      %p162 = por %p160, %p161
      %p163 = scmp.ne.s32.totalorder %s154, %s155
      %p164 = scmp.eq.s32.totalorder %s41, 0
      %p165 = por %p163, %p164
      %p166 = scmp.ne.s32.totalorder %s154, %s155
      %p167 = scmp.eq.s32.totalorder %s42, 1
      %p168 = por %p166, %p167
      %p170 = scmp.ne.s32.totalorder %s155, %s169
      %p171 = scmp.eq.s32.totalorder %s42, 0
      %p172 = por %p170, %p171
      %s174 = sadd.s32 %s173, 1
      %p177 = scmp.eq.s32.totalorder %s36, 1
      %p178 = scmp.ne.s32.totalorder %s173, %s175
      %p179 = scmp.eq.s32.totalorder %s36, 0
      %p180 = por %p178, %p179
      %p181 = scmp.ne.s32.totalorder %s173, %s175
      %p182 = scmp.eq.s32.totalorder %s41, 1
      %p183 = por %p181, %p182
      %p184 = scmp.ne.s32.totalorder %s175, %s176
      %p185 = scmp.eq.s32.totalorder %s41, 0
      %p186 = por %p184, %p185
      %p187 = scmp.ne.s32.totalorder %s175, %s176
      %p188 = scmp.eq.s32.totalorder %s42, 1
      %p189 = por %p187, %p188
      %p191 = scmp.ne.s32.totalorder %s176, %s190
      %p192 = scmp.eq.s32.totalorder %s42, 0
      %p193 = por %p191, %p192
      %s195 = sadd.s32 %s194, 1
      %p198 = scmp.eq.s32.totalorder %s36, 1
      %p199 = scmp.ne.s32.totalorder %s194, %s196
      %p200 = scmp.eq.s32.totalorder %s36, 0
      %p201 = por %p199, %p200
      %p202 = scmp.ne.s32.totalorder %s194, %s196
      %p203 = scmp.eq.s32.totalorder %s41, 1
      %p204 = por %p202, %p203
      %p205 = scmp.ne.s32.totalorder %s196, %s197
      %p206 = scmp.eq.s32.totalorder %s41, 0
      %p207 = por %p205, %p206
      %p208 = scmp.ne.s32.totalorder %s196, %s197
      %p209 = scmp.eq.s32.totalorder %s42, 1
      %p210 = por %p208, %p209
      %p212 = scmp.ne.s32.totalorder %s197, %s211
      %p213 = scmp.eq.s32.totalorder %s42, 0
      %p214 = por %p212, %p213
      %s216 = sadd.s32 %s215, 1
      %p219 = scmp.eq.s32.totalorder %s36, 1
      %p220 = scmp.ne.s32.totalorder %s215, %s217
      %p221 = scmp.eq.s32.totalorder %s36, 0
      %p222 = por %p220, %p221
      %p223 = scmp.ne.s32.totalorder %s215, %s217
      %p224 = scmp.eq.s32.totalorder %s41, 1
      %p225 = por %p223, %p224
      %p226 = scmp.ne.s32.totalorder %s217, %s218
      %p227 = scmp.eq.s32.totalorder %s41, 0
      %p228 = por %p226, %p227
      %p229 = scmp.ne.s32.totalorder %s217, %s218
      %p230 = scmp.eq.s32.totalorder %s42, 1
      %p231 = por %p229, %p230
      %p233 = scmp.ne.s32.totalorder %s218, %s232
      %p234 = scmp.eq.s32.totalorder %s42, 0
      %p235 = por %p233, %p234
      %s237 = sadd.s32 %s236, 1
      %p240 = scmp.eq.s32.totalorder %s36, 1
      %p241 = scmp.ne.s32.totalorder %s236, %s238
      %p242 = scmp.eq.s32.totalorder %s36, 0
      %p243 = por %p241, %p242
      %p244 = scmp.ne.s32.totalorder %s236, %s238
      %p245 = scmp.eq.s32.totalorder %s41, 1
      %p246 = por %p244, %p245
      %p247 = scmp.ne.s32.totalorder %s238, %s239
      %p248 = scmp.eq.s32.totalorder %s41, 0
      %p249 = por %p247, %p248
      %p250 = scmp.ne.s32.totalorder %s238, %s239
      %p251 = scmp.eq.s32.totalorder %s42, 1
      %p252 = por %p250, %p251
      %p254 = scmp.ne.s32.totalorder %s239, %s253
      %p255 = scmp.eq.s32.totalorder %s42, 0
      %p256 = por %p254, %p255
      %s258 = sadd.s32 %s257, 1
      %p261 = scmp.eq.s32.totalorder %s36, 1
      %p262 = scmp.ne.s32.totalorder %s257, %s259
      %p263 = scmp.eq.s32.totalorder %s36, 0
      %p264 = por %p262, %p263
      %p265 = scmp.ne.s32.totalorder %s257, %s259
      %p266 = scmp.eq.s32.totalorder %s41, 1
      %p267 = por %p265, %p266
      %p268 = scmp.ne.s32.totalorder %s259, %s260
      %p269 = scmp.eq.s32.totalorder %s41, 0
      %p270 = por %p268, %p269
      %p271 = scmp.ne.s32.totalorder %s259, %s260
      %p272 = scmp.eq.s32.totalorder %s42, 1
      %p273 = por %p271, %p272
      %p275 = scmp.ne.s32.totalorder %s260, %s274
      %p276 = scmp.eq.s32.totalorder %s42, 0
      %p277 = por %p275, %p276
      %s279 = sadd.s32 %s278, 1
      %p282 = scmp.eq.s32.totalorder %s36, 1
      %p283 = scmp.ne.s32.totalorder %s278, %s280
      %p284 = scmp.eq.s32.totalorder %s36, 0
      %p285 = por %p283, %p284
      %p286 = scmp.ne.s32.totalorder %s278, %s280
      %p287 = scmp.eq.s32.totalorder %s41, 1
      %p288 = por %p286, %p287
      %p289 = scmp.ne.s32.totalorder %s280, %s281
      %p290 = scmp.eq.s32.totalorder %s41, 0
      %p291 = por %p289, %p290
      %p292 = scmp.ne.s32.totalorder %s280, %s281
      %p293 = scmp.eq.s32.totalorder %s42, 1
      %p294 = por %p292, %p293
      %p296 = scmp.ne.s32.totalorder %s281, %s295
      %p297 = scmp.eq.s32.totalorder %s42, 0
      %p298 = por %p296, %p297
      %s300 = sadd.s32 %s299, 1
      %p303 = scmp.eq.s32.totalorder %s36, 1
      %p304 = scmp.ne.s32.totalorder %s299, %s301
      %p305 = scmp.eq.s32.totalorder %s36, 0
      %p306 = por %p304, %p305
      %p307 = scmp.ne.s32.totalorder %s299, %s301
      %p308 = scmp.eq.s32.totalorder %s41, 1
      %p309 = por %p307, %p308
      %p310 = scmp.ne.s32.totalorder %s301, %s302
      %p311 = scmp.eq.s32.totalorder %s41, 0
      %p312 = por %p310, %p311
      %p313 = scmp.ne.s32.totalorder %s301, %s302
      %p314 = scmp.eq.s32.totalorder %s42, 1
      %p315 = por %p313, %p314
      %p317 = scmp.ne.s32.totalorder %s302, %s316
      %p318 = scmp.eq.s32.totalorder %s42, 0
      %p319 = por %p317, %p318
      %s321 = sadd.s32 %s320, 1
      %p324 = scmp.eq.s32.totalorder %s36, 1
      %p325 = scmp.ne.s32.totalorder %s320, %s322
      %p326 = scmp.eq.s32.totalorder %s36, 0
      %p327 = por %p325, %p326
      %p328 = scmp.ne.s32.totalorder %s320, %s322
      %p329 = scmp.eq.s32.totalorder %s41, 1
      %p330 = por %p328, %p329
      %p331 = scmp.ne.s32.totalorder %s322, %s323
      %p332 = scmp.eq.s32.totalorder %s41, 0
      %p333 = por %p331, %p332
      %p334 = scmp.ne.s32.totalorder %s322, %s323
      %p335 = scmp.eq.s32.totalorder %s42, 1
      %p336 = por %p334, %p335
      %p338 = scmp.ne.s32.totalorder %s323, %s337
      %p339 = scmp.eq.s32.totalorder %s42, 0
      %p340 = por %p338, %p339
      %s342 = sadd.s32 %s341, 1
      %p345 = scmp.eq.s32.totalorder %s36, 1
      %p346 = scmp.ne.s32.totalorder %s341, %s343
      %p347 = scmp.eq.s32.totalorder %s36, 0
      %p348 = por %p346, %p347
      %p349 = scmp.ne.s32.totalorder %s341, %s343
      %p350 = scmp.eq.s32.totalorder %s41, 1
      %p351 = por %p349, %p350
      %p352 = scmp.ne.s32.totalorder %s343, %s344
      %p353 = scmp.eq.s32.totalorder %s41, 0
      %p354 = por %p352, %p353
      %p355 = scmp.ne.s32.totalorder %s343, %s344
      %p356 = scmp.eq.s32.totalorder %s42, 1
      %p357 = por %p355, %p356
      %p359 = scmp.ne.s32.totalorder %s344, %s358
      %p360 = scmp.eq.s32.totalorder %s42, 0
      %p361 = por %p359, %p360
      %s363 = sadd.s32 %s362, 1
      %p366 = scmp.eq.s32.totalorder %s36, 1
      %p367 = scmp.ne.s32.totalorder %s362, %s364
      %p368 = scmp.eq.s32.totalorder %s36, 0
      %p369 = por %p367, %p368
      %p370 = scmp.ne.s32.totalorder %s362, %s364
      %p371 = scmp.eq.s32.totalorder %s41, 1
      %p372 = por %p370, %p371
      %p373 = scmp.ne.s32.totalorder %s364, %s365
      %p374 = scmp.eq.s32.totalorder %s41, 0
      %p375 = por %p373, %p374
      %p376 = scmp.ne.s32.totalorder %s364, %s365
      %p377 = scmp.eq.s32.totalorder %s42, 1
      %p378 = por %p376, %p377
      %p380 = scmp.ne.s32.totalorder %s365, %s379
      %p381 = scmp.eq.s32.totalorder %s42, 0
      %p382 = por %p380, %p381
      %s384 = sadd.s32 %s383, 1
      %p387 = scmp.eq.s32.totalorder %s36, 1
      %p388 = scmp.ne.s32.totalorder %s383, %s385
      %p389 = scmp.eq.s32.totalorder %s36, 0
      %p390 = por %p388, %p389
      %p391 = scmp.ne.s32.totalorder %s383, %s385
      %p392 = scmp.eq.s32.totalorder %s41, 1
      %p393 = por %p391, %p392
      %p394 = scmp.ne.s32.totalorder %s385, %s386
      %p395 = scmp.eq.s32.totalorder %s41, 0
      %p396 = por %p394, %p395
      %p397 = scmp.ne.s32.totalorder %s385, %s386
      %p398 = scmp.eq.s32.totalorder %s42, 1
      %p399 = por %p397, %p398
      %p401 = scmp.ne.s32.totalorder %s386, %s400
      %p402 = scmp.eq.s32.totalorder %s42, 0
      %p403 = por %p401, %p402
      %s405 = sadd.s32 %s404, 1
      %p408 = scmp.eq.s32.totalorder %s36, 1
      %p409 = scmp.ne.s32.totalorder %s404, %s406
      %p410 = scmp.eq.s32.totalorder %s36, 0
      %p411 = por %p409, %p410
      %p412 = scmp.ne.s32.totalorder %s404, %s406
      %p413 = scmp.eq.s32.totalorder %s41, 1
      %p414 = por %p412, %p413
      %p415 = scmp.ne.s32.totalorder %s406, %s407
      %p416 = scmp.eq.s32.totalorder %s41, 0
      %p417 = por %p415, %p416
      %p418 = scmp.ne.s32.totalorder %s406, %s407
      %p419 = scmp.eq.s32.totalorder %s42, 1
      %p420 = por %p418, %p419
      %p422 = scmp.ne.s32.totalorder %s407, %s421
      %p423 = scmp.eq.s32.totalorder %s42, 0
      %p424 = por %p422, %p423
      %s426 = sadd.s32 %s425, 1
      %p429 = scmp.eq.s32.totalorder %s36, 1
      %p430 = scmp.ne.s32.totalorder %s425, %s427
      %p431 = scmp.eq.s32.totalorder %s36, 0
      %p432 = por %p430, %p431
      %p433 = scmp.ne.s32.totalorder %s425, %s427
      %p434 = scmp.eq.s32.totalorder %s41, 1
      %p435 = por %p433, %p434
      %p436 = scmp.ne.s32.totalorder %s427, %s428
      %p437 = scmp.eq.s32.totalorder %s41, 0
      %p438 = por %p436, %p437
      %p439 = scmp.ne.s32.totalorder %s427, %s428
      %p440 = scmp.eq.s32.totalorder %s42, 1
      %p441 = por %p439, %p440
      %p443 = scmp.ne.s32.totalorder %s428, %s442
      %p444 = scmp.eq.s32.totalorder %s42, 0
      %p445 = por %p443, %p444
      %s446 = ssub.s32 %s43, %s55
      %s447 = ssub.s32 %s44, %s51
      %s448 = sor.u32 %s446, %s447
      %p449 = scmp.eq.s32.totalorder %s448, 0
      %s451 = sadd.s32 %s450, 1
      %s452 = scalar_select %p449, %s450, %s451
      %p455 = pneg %p449
      %p456 = scmp.eq.s32.totalorder %s36, 1
      %p457 = por %p455, %p456
      %p458 = scmp.ne.s32.totalorder %s450, %s453
      %p459 = scmp.eq.s32.totalorder %s36, 0
      %p460 = por %p458, %p459
      %p461 = scmp.ne.s32.totalorder %s450, %s453
      %p462 = scmp.eq.s32.totalorder %s41, 1
      %p463 = por %p461, %p462
      %p464 = scmp.ne.s32.totalorder %s453, %s454
      %p465 = scmp.eq.s32.totalorder %s41, 0
      %p466 = por %p464, %p465
      %p467 = scmp.ne.s32.totalorder %s453, %s454
      %p468 = scmp.eq.s32.totalorder %s42, 1
      %p469 = por %p467, %p468
      %p471 = scmp.ne.s32.totalorder %s454, %s470
      %p472 = scmp.eq.s32.totalorder %s42, 0
      %p473 = por %p471, %p472
      %p474 = scmp.le.s32.totalorder 1, %s36
      %p475 = scmp.lt.s32.totalorder %s36, 3
      %p476 = pnand %p474, %p475
      %p477 = pneg %p476
      // Predicated region
      $region9: #{tpu_custom_call.1} parent=5 // pred_check
        _
      $region10: #{tpu_custom_call.1} parent=5 // pred_check_branch
        %479 = sbr.rel (%p476) target = $region12
      $region11: #{tpu_custom_call.1} parent=5 // pred_region
        %s480 = ssub.s32 %s36, 1
        // Predicated region
        $region13: #{tpu_custom_call.1} parent=11 // pred_check
          %p481 = pneg %p123
        $region14: #{tpu_custom_call.1} parent=11 // pred_check_branch
          %483 = sbr.rel (%p481) target = $region16
        $region15: #{tpu_custom_call.1} parent=11 // pred_region
          %485 = vsyncadd [#allocation7], 0
          %s486 = sshll.u32 %s2, 4
          %s487 = int_to_ptr.hbm [resolvable:$true] %s486
          %s488 = sshll.u32 [#allocation8], 4
          %s489 = int_to_ptr.vmem [resolvable:$true] %s488
          %494 = dma.hbm_to_vmem [thread:$0]  %s487, 1024, %s489, [#allocation7], 64, 64, 4
        $region16: #{tpu_custom_call.1} parent=11 // pred_fallthru
          _
        // Predicated region
        $region17: #{tpu_custom_call.1} parent=11 // pred_check
          %p495 = pneg %p144
        $region18: #{tpu_custom_call.1} parent=11 // pred_check_branch
          %497 = sbr.rel (%p495) target = $region20
        $region19: #{tpu_custom_call.1} parent=11 // pred_region
          _
        $region20: #{tpu_custom_call.1} parent=11 // pred_fallthru
          _
        // Predicated region
        $region21: #{tpu_custom_call.1} parent=11 // pred_check
          %p498 = pneg %p165
        $region22: #{tpu_custom_call.1} parent=11 // pred_check_branch
          %500 = sbr.rel (%p498) target = $region24
        $region23: #{tpu_custom_call.1} parent=11 // pred_region
          %502 = vsyncadd [#allocation10], 0
          %s503 = sshll.u32 %s4, 4
          %s504 = int_to_ptr.hbm [resolvable:$true] %s503
          %s505 = sshll.u32 [#allocation9], 4
          %s506 = int_to_ptr.vmem [resolvable:$true] %s505
          %511 = dma.hbm_to_vmem [thread:$0]  %s504, 1024, %s506, [#allocation10], 64, 64, 4
        $region24: #{tpu_custom_call.1} parent=11 // pred_fallthru
          _
        // Predicated region
        $region25: #{tpu_custom_call.1} parent=11 // pred_check
          %p512 = pneg %p186
        $region26: #{tpu_custom_call.1} parent=11 // pred_check_branch
          %514 = sbr.rel (%p512) target = $region28
        $region27: #{tpu_custom_call.1} parent=11 // pred_region
          _
        $region28: #{tpu_custom_call.1} parent=11 // pred_fallthru
          _
        // Predicated region
        $region29: #{tpu_custom_call.1} parent=11 // pred_check
          %p515 = pneg %p207
        $region30: #{tpu_custom_call.1} parent=11 // pred_check_branch
          %517 = sbr.rel (%p515) target = $region32
        $region31: #{tpu_custom_call.1} parent=11 // pred_region
          %519 = vsyncadd [#allocation10], 0
          %s520 = sshll.u32 %s6, 4
          %s521 = int_to_ptr.hbm [resolvable:$true] %s520
          %s522 = sshll.u32 [#allocation11], 4
          %s523 = int_to_ptr.vmem [resolvable:$true] %s522
          %528 = dma.hbm_to_vmem [thread:$0]  %s521, 1024, %s523, [#allocation10], 64, 64, 4
        $region32: #{tpu_custom_call.1} parent=11 // pred_fallthru
          _
        // Predicated region
        $region33: #{tpu_custom_call.1} parent=11 // pred_check
          %p529 = pneg %p228
        $region34: #{tpu_custom_call.1} parent=11 // pred_check_branch
          %531 = sbr.rel (%p529) target = $region36
        $region35: #{tpu_custom_call.1} parent=11 // pred_region
          _
        $region36: #{tpu_custom_call.1} parent=11 // pred_fallthru
          _
        // Predicated region
        $region37: #{tpu_custom_call.1} parent=11 // pred_check
          %p532 = pneg %p249
        $region38: #{tpu_custom_call.1} parent=11 // pred_check_branch
          %534 = sbr.rel (%p532) target = $region40
        $region39: #{tpu_custom_call.1} parent=11 // pred_region
          %536 = vsyncadd [#allocation13], 0
          %s537 = sshll.u32 %s8, 4
          %s538 = int_to_ptr.hbm [resolvable:$true] %s537
          %s539 = sshll.u32 [#allocation12], 4
          %s540 = int_to_ptr.vmem [resolvable:$true] %s539
          %545 = dma.hbm_to_vmem [thread:$0]  %s538, 1024, %s540, [#allocation13], 64, 64, 4
        $region40: #{tpu_custom_call.1} parent=11 // pred_fallthru
          _
        // Predicated region
        $region41: #{tpu_custom_call.1} parent=11 // pred_check
          %p546 = pneg %p270
        $region42: #{tpu_custom_call.1} parent=11 // pred_check_branch
          %548 = sbr.rel (%p546) target = $region44
        $region43: #{tpu_custom_call.1} parent=11 // pred_region
          _
        $region44: #{tpu_custom_call.1} parent=11 // pred_fallthru
          _
        // Predicated region
        $region45: #{tpu_custom_call.1} parent=11 // pred_check
          %p549 = pneg %p291
        $region46: #{tpu_custom_call.1} parent=11 // pred_check_branch
          %551 = sbr.rel (%p549) target = $region48
        $region47: #{tpu_custom_call.1} parent=11 // pred_region
          _
        $region48: #{tpu_custom_call.1} parent=11 // pred_fallthru
          _
        // Predicated region
        $region49: #{tpu_custom_call.1} parent=11 // pred_check
          %p552 = pneg %p312
        $region50: #{tpu_custom_call.1} parent=11 // pred_check_branch
          %554 = sbr.rel (%p552) target = $region52
        $region51: #{tpu_custom_call.1} parent=11 // pred_region
          _
        $region52: #{tpu_custom_call.1} parent=11 // pred_fallthru
          _
        // Predicated region
        $region53: #{tpu_custom_call.1} parent=11 // pred_check
          %p555 = pneg %p333
        $region54: #{tpu_custom_call.1} parent=11 // pred_check_branch
          %557 = sbr.rel (%p555) target = $region56
        $region55: #{tpu_custom_call.1} parent=11 // pred_region
          %559 = vsyncadd [#allocation13], 0
          %s560 = sshll.u32 %s12, 4
          %s561 = int_to_ptr.hbm [resolvable:$true] %s560
          %s562 = sshll.u32 [#allocation14], 4
          %s563 = int_to_ptr.vmem [resolvable:$true] %s562
          %568 = dma.hbm_to_vmem [thread:$0]  %s561, 2048, %s563, [#allocation13], 128, 128, 8
        $region56: #{tpu_custom_call.1} parent=11 // pred_fallthru
          _
        // Predicated region
        $region57: #{tpu_custom_call.1} parent=11 // pred_check
          %p569 = pneg %p354
        $region58: #{tpu_custom_call.1} parent=11 // pred_check_branch
          %571 = sbr.rel (%p569) target = $region60
        $region59: #{tpu_custom_call.1} parent=11 // pred_region
          _
        $region60: #{tpu_custom_call.1} parent=11 // pred_fallthru
          _
        // Predicated region
        $region61: #{tpu_custom_call.1} parent=11 // pred_check
          %p572 = pneg %p375
        $region62: #{tpu_custom_call.1} parent=11 // pred_check_branch
          %574 = sbr.rel (%p572) target = $region64
        $region63: #{tpu_custom_call.1} parent=11 // pred_region
          %576 = vsyncadd [#allocation16], 0
          %s577 = sshll.u32 %s14, 4
          %s578 = int_to_ptr.hbm [resolvable:$true] %s577
          %s579 = sshll.u32 [#allocation15], 4
          %s580 = int_to_ptr.vmem [resolvable:$true] %s579
          %585 = dma.hbm_to_vmem [thread:$0]  %s578, 2048, %s580, [#allocation16], 64, 64, 4
        $region64: #{tpu_custom_call.1} parent=11 // pred_fallthru
          _
        // Predicated region
        $region65: #{tpu_custom_call.1} parent=11 // pred_check
          %p586 = pneg %p396
        $region66: #{tpu_custom_call.1} parent=11 // pred_check_branch
          %588 = sbr.rel (%p586) target = $region68
        $region67: #{tpu_custom_call.1} parent=11 // pred_region
          _
        $region68: #{tpu_custom_call.1} parent=11 // pred_fallthru
          _
        // Predicated region
        $region69: #{tpu_custom_call.1} parent=11 // pred_check
          %p589 = pneg %p417
        $region70: #{tpu_custom_call.1} parent=11 // pred_check_branch
          %591 = sbr.rel (%p589) target = $region72
        $region71: #{tpu_custom_call.1} parent=11 // pred_region
          _
        $region72: #{tpu_custom_call.1} parent=11 // pred_fallthru
          _
        // Predicated region
        $region73: #{tpu_custom_call.1} parent=11 // pred_check
          %p592 = pneg %p438
        $region74: #{tpu_custom_call.1} parent=11 // pred_check_branch
          %594 = sbr.rel (%p592) target = $region76
        $region75: #{tpu_custom_call.1} parent=11 // pred_region
          _
        $region76: #{tpu_custom_call.1} parent=11 // pred_fallthru
          _
      $region12: #{tpu_custom_call.1} parent=5 // pred_fallthru
        _
      %p595 = scmp.lt.s32.totalorder %s36, 2
      // Predicated region
      $region77: #{tpu_custom_call.1} parent=5 // pred_check
        %p596 = pneg %p595
      $region78: #{tpu_custom_call.1} parent=5 // pred_check_branch
        %598 = sbr.rel (%p596) target = $region80
      $region79: #{tpu_custom_call.1} parent=5 // pred_region
        // Predicated region
        $region81: #{tpu_custom_call.1} parent=79 // pred_check
          %p599 = pneg %p70
        $region82: #{tpu_custom_call.1} parent=79 // pred_check_branch
          %601 = sbr.rel (%p599) target = $region84
        $region83: #{tpu_custom_call.1} parent=79 // pred_region
          %s602 = sand.u32 %s60, 1
          %s603 = scalar_lea.sflag [#allocation4], %s602
          %s604 = sand.u32 %s60, 1
          %s605 = smul.addr %s604, 8
          %s606 = scalar_lea.vmem [#allocation3], %s605
          %608 = vsyncadd %s603, 0
          %s609 = sadd.s32 %s44, %s43
          %s610 = smul.addr %s609, 8
          %s611 = scalar_lea.hbm %s0, %s610
          %s613 = sshll.u32 %s611, 4
          %s614 = int_to_ptr.hbm [resolvable:$true] %s613
          %s615 = sshll.u32 %s606, 4
          %s616 = int_to_ptr.vmem [resolvable:$true] %s615
          %618 = dma.hbm_to_vmem [thread:$0]  %s614, 128, %s616, %s603
        $region84: #{tpu_custom_call.1} parent=79 // pred_fallthru
          _
        // Predicated region
        $region85: #{tpu_custom_call.1} parent=79 // pred_check
          %p619 = pneg %p96
        $region86: #{tpu_custom_call.1} parent=79 // pred_check_branch
          %621 = sbr.rel (%p619) target = $region88
        $region87: #{tpu_custom_call.1} parent=79 // pred_region
          %s622 = sand.u32 %s36, 1
          %s623 = scalar_lea.sflag [#allocation7], %s622
          %s624 = sand.u32 %s86, 1
          %s625 = smul.addr %s624, 16
          %s626 = scalar_lea.vmem [#allocation6], %s625
          %628 = vsyncadd %s623, 0
          %s629 = smul.addr %s43, 2
          %s630 = smul.addr %s629, 8
          %s631 = scalar_lea.hbm %s1, %s630
          %s632 = sshll.u32 %s631, 4
          %s633 = int_to_ptr.hbm [resolvable:$true] %s632
          %s634 = sshll.u32 %s626, 4
          %s635 = int_to_ptr.vmem [resolvable:$true] %s634
          %640 = dma.hbm_to_vmem [thread:$0]  %s633, 256, %s635, %s623, 128, 128, 8
        $region88: #{tpu_custom_call.1} parent=79 // pred_fallthru
          _
      $region80: #{tpu_custom_call.1} parent=5 // pred_fallthru
        _
      %p641 = scmp.le.s32.totalorder 1, %s36
      %p642 = scmp.lt.s32.totalorder %s36, 3
      %p643 = pnand %p641, %p642
      %p644 = pneg %p643
      // Predicated region
      $region89: #{tpu_custom_call.1} parent=5 // pred_check
        _
      $region90: #{tpu_custom_call.1} parent=5 // pred_check_branch
        %646 = sbr.rel (%p643) target = $region92
      $region91: #{tpu_custom_call.1} parent=5 // pred_region
        %s647 = ssub.s32 %s36, 1
        %s648 = sand.u32 %s63, 1
        %s649 = scalar_lea.sflag [#allocation4], %s648
        %s650 = sand.u32 %s63, 1
        %s651 = smul.addr %s650, 8
        %s652 = scalar_lea.vmem [#allocation3], %s651
        // Predicated region
        $region93: #{tpu_custom_call.1} parent=91 // pred_check
          %p653 = pneg %p76
        $region94: #{tpu_custom_call.1} parent=91 // pred_check_branch
          %655 = sbr.rel (%p653) target = $region96
        $region95: #{tpu_custom_call.1} parent=91 // pred_region
          %657 = dma.done %s649, 128
        $region96: #{tpu_custom_call.1} parent=91 // pred_fallthru
          _
        %s658 = sand.u32 %s41, 1
        %s659 = scalar_lea.sflag [#allocation7], %s658
        %s660 = sand.u32 %s89, 1
        %s661 = smul.addr %s660, 16
        %s662 = scalar_lea.vmem [#allocation6], %s661
        // Predicated region
        $region97: #{tpu_custom_call.1} parent=91 // pred_check
          %p663 = pneg %p102
        $region98: #{tpu_custom_call.1} parent=91 // pred_check_branch
          %665 = sbr.rel (%p663) target = $region100
        $region99: #{tpu_custom_call.1} parent=91 // pred_region
          %667 = dma.done %s659, 256
        $region100: #{tpu_custom_call.1} parent=91 // pred_fallthru
          _
        // Predicated region
        $region101: #{tpu_custom_call.1} parent=91 // pred_check
          %p668 = pneg %p123
        $region102: #{tpu_custom_call.1} parent=91 // pred_check_branch
          %670 = sbr.rel (%p668) target = $region104
        $region103: #{tpu_custom_call.1} parent=91 // pred_region
          %672 = dma.done [#allocation7], 1024
        $region104: #{tpu_custom_call.1} parent=91 // pred_fallthru
          _
        // Predicated region
        $region105: #{tpu_custom_call.1} parent=91 // pred_check
          %p673 = pneg %p165
        $region106: #{tpu_custom_call.1} parent=91 // pred_check_branch
          %675 = sbr.rel (%p673) target = $region108
        $region107: #{tpu_custom_call.1} parent=91 // pred_region
          %677 = dma.done [#allocation10], 1024
        $region108: #{tpu_custom_call.1} parent=91 // pred_fallthru
          _
        // Predicated region
        $region109: #{tpu_custom_call.1} parent=91 // pred_check
          %p678 = pneg %p207
        $region110: #{tpu_custom_call.1} parent=91 // pred_check_branch
          %680 = sbr.rel (%p678) target = $region112
        $region111: #{tpu_custom_call.1} parent=91 // pred_region
          %682 = dma.done [#allocation10], 1024
        $region112: #{tpu_custom_call.1} parent=91 // pred_fallthru
          _
        // Predicated region
        $region113: #{tpu_custom_call.1} parent=91 // pred_check
          %p683 = pneg %p249
        $region114: #{tpu_custom_call.1} parent=91 // pred_check_branch
          %685 = sbr.rel (%p683) target = $region116
        $region115: #{tpu_custom_call.1} parent=91 // pred_region
          %687 = dma.done [#allocation13], 1024
        $region116: #{tpu_custom_call.1} parent=91 // pred_fallthru
          _
        // Predicated region
        $region117: #{tpu_custom_call.1} parent=91 // pred_check
          %p688 = pneg %p333
        $region118: #{tpu_custom_call.1} parent=91 // pred_check_branch
          %690 = sbr.rel (%p688) target = $region120
        $region119: #{tpu_custom_call.1} parent=91 // pred_region
          %692 = dma.done [#allocation13], 2048
        $region120: #{tpu_custom_call.1} parent=91 // pred_fallthru
          _
        // Predicated region
        $region121: #{tpu_custom_call.1} parent=91 // pred_check
          %p693 = pneg %p375
        $region122: #{tpu_custom_call.1} parent=91 // pred_check_branch
          %695 = sbr.rel (%p693) target = $region124
        $region123: #{tpu_custom_call.1} parent=91 // pred_region
          %697 = dma.done [#allocation16], 2048
        $region124: #{tpu_custom_call.1} parent=91 // pred_fallthru
          _
        %s698 = sand.u32 %s63, 1
        %s699 = scalar_lea.sflag [#allocation4], %s698
        %s700 = sand.u32 %s63, 1
        %s701 = smul.addr %s700, 8
        %s702 = scalar_lea.vmem [#allocation3], %s701
        %p703 = pneg %p76
        %p704 = pneg %p73
        %s705 = sand.u32 %s41, 1
        %s706 = scalar_lea.sflag [#allocation7], %s705
        %s707 = sand.u32 %s89, 1
        %s708 = smul.addr %s707, 16
        %s709 = scalar_lea.vmem [#allocation6], %s708
        %p710 = pneg %p102
        %p711 = pneg %p99
        %p712 = pneg %p123
        %p713 = pneg %p120
        %p714 = pneg %p144
        %p715 = pneg %p141
        %p716 = pneg %p165
        %p717 = pneg %p162
        %p718 = pneg %p186
        %p719 = pneg %p183
        %p720 = pneg %p207
        %p721 = pneg %p204
        %p722 = pneg %p228
        %p723 = pneg %p225
        %p724 = pneg %p249
        %p725 = pneg %p246
        %p726 = pneg %p270
        %p727 = pneg %p267
        %p728 = pneg %p291
        %p729 = pneg %p288
        %p730 = pneg %p312
        %p731 = pneg %p309
        %p732 = pneg %p333
        %p733 = pneg %p330
        %p734 = pneg %p354
        %p735 = pneg %p351
        %p736 = pneg %p375
        %p737 = pneg %p372
        %p738 = pneg %p396
        %p739 = pneg %p393
        %p740 = pneg %p417
        %p741 = pneg %p414
        %p742 = pneg %p438
        %p743 = pneg %p435
        %p744 = pneg %p466
        %p745 = pneg %p463
        %s746 = sand.u32 %s453, 1
        %s747 = scalar_lea.sflag [#allocation5], %s746
        %s748 = sand.u32 %s453, 1
        %s749 = smul.addr %s748, 8
        %s750 = scalar_lea.vmem [#allocation17], %s749
        %v752 = vld [vmem:[%s652] sm:$0xff]
        %v753 = vpack.c.bf16 %v752, %v752
        %v754 = vld [vmem:[%s662] sm:$0xff]
        %v755 = vld [vmem:[%s662 + $0x8] sm:$0xff]
        %v756 = vpack.c.bf16 %v755, %v754
        %v757 = vld [vmem:[#allocation8] sm:$0xf]
        %v758 = vld [vmem:[#allocation8 + $0x4] sm:$0xf]
        %v759 = vld [vmem:[#allocation8 + $0x8] sm:$0xf]
        %v760 = vld [vmem:[#allocation8 + $0xc] sm:$0xf]
        %v761 = vld [vmem:[#allocation8 + $0x10] sm:$0xf]
        %v762 = vld [vmem:[#allocation8 + $0x14] sm:$0xf]
        %v763 = vld [vmem:[#allocation8 + $0x18] sm:$0xf]
        %v764 = vld [vmem:[#allocation8 + $0x1c] sm:$0xf]
        %v765 = vld [vmem:[#allocation8 + $0x20] sm:$0xf]
        %v766 = vld [vmem:[#allocation8 + $0x24] sm:$0xf]
        %v767 = vld [vmem:[#allocation8 + $0x28] sm:$0xf]
        %v768 = vld [vmem:[#allocation8 + $0x2c] sm:$0xf]
        %v769 = vld [vmem:[#allocation8 + $0x30] sm:$0xf]
        %v770 = vld [vmem:[#allocation8 + $0x34] sm:$0xf]
        %v771 = vld [vmem:[#allocation8 + $0x38] sm:$0xf]
        %v772 = vld [vmem:[#allocation8 + $0x3c] sm:$0xf]
        %v773 = vld [vmem:[%s3] sm:$0x1]
        %v775 = vperm.slane %v773, 0
        %v793 = vunpack.c.l.b16 %v757
        %v794 = vunpack.c.l.b16 %v758
        %v795 = vunpack.c.l.b16 %v759
        %v796 = vunpack.c.l.b16 %v760
        %v797 = vunpack.c.l.b16 %v761
        %v798 = vunpack.c.l.b16 %v762
        %v799 = vunpack.c.l.b16 %v763
        %v800 = vunpack.c.l.b16 %v764
        %v801 = vunpack.c.l.b16 %v765
        %v802 = vunpack.c.l.b16 %v766
        %v803 = vunpack.c.l.b16 %v767
        %v804 = vunpack.c.l.b16 %v768
        %v805 = vunpack.c.l.b16 %v769
        %v806 = vunpack.c.l.b16 %v770
        %v807 = vunpack.c.l.b16 %v771
        %v808 = vunpack.c.l.b16 %v772
        %v809 = vpack.c.b16 %v794, %v793
        %v810 = vpack.c.b16 %v796, %v795
        %v811 = vpack.c.b16 %v798, %v797
        %v812 = vpack.c.b16 %v800, %v799
        %v813 = vpack.c.b16 %v802, %v801
        %v814 = vpack.c.b16 %v804, %v803
        %v815 = vpack.c.b16 %v806, %v805
        %v816 = vpack.c.b16 %v808, %v807
        %825 = vmatpush.bf16.msra.mxu0 %v816
        %826 = vmatpush.bf16.msra.mxu0 %v815
        %827 = vmatpush.bf16.msra.mxu0 %v814
        %828 = vmatpush.bf16.msra.mxu0 %v813
        %829 = vmatpush.bf16.msra.mxu0 %v812
        %830 = vmatpush.bf16.msra.mxu0 %v811
        %831 = vmatpush.bf16.msra.mxu0 %v810
        %832 = vmatpush.bf16.msra.mxu0 %v809
        %833 = vmatmul.bf16.gmra.mxu0 %v753
        %v834 = vpop.f32.mrf.mxu0
        %v835 = vadd.f32 %v775, %v834
        %v836 = vpop.f32.mrf.mxu0
        %837 = vdwg.mxu0
        %v838 = vld [vmem:[#allocation9] sm:$0xf]
        %v839 = vld [vmem:[#allocation9 + $0x4] sm:$0xf]
        %v840 = vld [vmem:[#allocation9 + $0x8] sm:$0xf]
        %v841 = vld [vmem:[#allocation9 + $0xc] sm:$0xf]
        %v842 = vld [vmem:[#allocation9 + $0x10] sm:$0xf]
        %v843 = vld [vmem:[#allocation9 + $0x14] sm:$0xf]
        %v844 = vld [vmem:[#allocation9 + $0x18] sm:$0xf]
        %v845 = vld [vmem:[#allocation9 + $0x1c] sm:$0xf]
        %v846 = vld [vmem:[#allocation9 + $0x20] sm:$0xf]
        %v847 = vld [vmem:[#allocation9 + $0x24] sm:$0xf]
        %v848 = vld [vmem:[#allocation9 + $0x28] sm:$0xf]
        %v849 = vld [vmem:[#allocation9 + $0x2c] sm:$0xf]
        %v850 = vld [vmem:[#allocation9 + $0x30] sm:$0xf]
        %v851 = vld [vmem:[#allocation9 + $0x34] sm:$0xf]
        %v852 = vld [vmem:[#allocation9 + $0x38] sm:$0xf]
        %v853 = vld [vmem:[#allocation9 + $0x3c] sm:$0xf]
        %v854 = vld [vmem:[%s5] sm:$0x1]
        %v856 = vperm.slane %v854, 0
        %v874 = vunpack.c.l.b16 %v838
        %v875 = vunpack.c.l.b16 %v839
        %v876 = vunpack.c.l.b16 %v840
        %v877 = vunpack.c.l.b16 %v841
        %v878 = vunpack.c.l.b16 %v842
        %v879 = vunpack.c.l.b16 %v843
        %v880 = vunpack.c.l.b16 %v844
        %v881 = vunpack.c.l.b16 %v845
        %v882 = vunpack.c.l.b16 %v846
        %v883 = vunpack.c.l.b16 %v847
        %v884 = vunpack.c.l.b16 %v848
        %v885 = vunpack.c.l.b16 %v849
        %v886 = vunpack.c.l.b16 %v850
        %v887 = vunpack.c.l.b16 %v851
        %v888 = vunpack.c.l.b16 %v852
        %v889 = vunpack.c.l.b16 %v853
        %v890 = vpack.c.b16 %v875, %v874
        %v891 = vpack.c.b16 %v877, %v876
        %v892 = vpack.c.b16 %v879, %v878
        %v893 = vpack.c.b16 %v881, %v880
        %v894 = vpack.c.b16 %v883, %v882
        %v895 = vpack.c.b16 %v885, %v884
        %v896 = vpack.c.b16 %v887, %v886
        %v897 = vpack.c.b16 %v889, %v888
        %906 = vmatpush.bf16.msra.mxu0 %v897
        %907 = vmatpush.bf16.msra.mxu0 %v896
        %908 = vmatpush.bf16.msra.mxu0 %v895
        %909 = vmatpush.bf16.msra.mxu0 %v894
        %910 = vmatpush.bf16.msra.mxu0 %v893
        %911 = vmatpush.bf16.msra.mxu0 %v892
        %912 = vmatpush.bf16.msra.mxu0 %v891
        %913 = vmatpush.bf16.msra.mxu0 %v890
        %914 = vmatmul.bf16.gmra.mxu0 %v756
        %v915 = vpop.f32.mrf.mxu0
        %v916 = vadd.f32 %v856, %v915
        %v917 = vpop.f32.mrf.mxu0
        %v918 = vadd.f32 %v856, %v917
        %919 = vdwg.mxu0
        %v920 = vld [vmem:[#allocation11] sm:$0xf]
        %v921 = vld [vmem:[#allocation11 + $0x4] sm:$0xf]
        %v922 = vld [vmem:[#allocation11 + $0x8] sm:$0xf]
        %v923 = vld [vmem:[#allocation11 + $0xc] sm:$0xf]
        %v924 = vld [vmem:[#allocation11 + $0x10] sm:$0xf]
        %v925 = vld [vmem:[#allocation11 + $0x14] sm:$0xf]
        %v926 = vld [vmem:[#allocation11 + $0x18] sm:$0xf]
        %v927 = vld [vmem:[#allocation11 + $0x1c] sm:$0xf]
        %v928 = vld [vmem:[#allocation11 + $0x20] sm:$0xf]
        %v929 = vld [vmem:[#allocation11 + $0x24] sm:$0xf]
        %v930 = vld [vmem:[#allocation11 + $0x28] sm:$0xf]
        %v931 = vld [vmem:[#allocation11 + $0x2c] sm:$0xf]
        %v932 = vld [vmem:[#allocation11 + $0x30] sm:$0xf]
        %v933 = vld [vmem:[#allocation11 + $0x34] sm:$0xf]
        %v934 = vld [vmem:[#allocation11 + $0x38] sm:$0xf]
        %v935 = vld [vmem:[#allocation11 + $0x3c] sm:$0xf]
        %v936 = vld [vmem:[%s7] sm:$0x1]
        %v938 = vperm.slane %v936, 0
        %v956 = vunpack.c.l.b16 %v920
        %v957 = vunpack.c.l.b16 %v921
        %v958 = vunpack.c.l.b16 %v922
        %v959 = vunpack.c.l.b16 %v923
        %v960 = vunpack.c.l.b16 %v924
        %v961 = vunpack.c.l.b16 %v925
        %v962 = vunpack.c.l.b16 %v926
        %v963 = vunpack.c.l.b16 %v927
        %v964 = vunpack.c.l.b16 %v928
        %v965 = vunpack.c.l.b16 %v929
        %v966 = vunpack.c.l.b16 %v930
        %v967 = vunpack.c.l.b16 %v931
        %v968 = vunpack.c.l.b16 %v932
        %v969 = vunpack.c.l.b16 %v933
        %v970 = vunpack.c.l.b16 %v934
        %v971 = vunpack.c.l.b16 %v935
        %v972 = vpack.c.b16 %v957, %v956
        %v973 = vpack.c.b16 %v959, %v958
        %v974 = vpack.c.b16 %v961, %v960
        %v975 = vpack.c.b16 %v963, %v962
        %v976 = vpack.c.b16 %v965, %v964
        %v977 = vpack.c.b16 %v967, %v966
        %v978 = vpack.c.b16 %v969, %v968
        %v979 = vpack.c.b16 %v971, %v970
        %988 = vmatpush.bf16.msra.mxu0 %v979
        %989 = vmatpush.bf16.msra.mxu0 %v978
        %990 = vmatpush.bf16.msra.mxu0 %v977
        %991 = vmatpush.bf16.msra.mxu0 %v976
        %992 = vmatpush.bf16.msra.mxu0 %v975
        %993 = vmatpush.bf16.msra.mxu0 %v974
        %994 = vmatpush.bf16.msra.mxu0 %v973
        %995 = vmatpush.bf16.msra.mxu0 %v972
        %996 = vmatmul.bf16.gmra.mxu0 %v756
        %v997 = vpop.f32.mrf.mxu0
        %v998 = vadd.f32 %v938, %v997
        %v999 = vpop.f32.mrf.mxu0
        %v1000 = vadd.f32 %v938, %v999
        %1001 = vdwg.mxu0
        %v1002 = vmul.f32 %v835, 0.17677669
        %v1003 = vpack.c.bf16 %v1002, %v1002
        %1004 = vxpose.xlu0.b32.start [1/16] %v916, 128
        %1005 = vxpose.xlu0.b32.cont [2/16] %v918, 128
        %1006 = vxpose.xlu0.b32.cont [3/16] 0.0, 128
        %1007 = vxpose.xlu0.b32.cont [4/16] 0.0, 128
        %1008 = vxpose.xlu0.b32.cont [5/16] 0.0, 128
        %1009 = vxpose.xlu0.b32.cont [6/16] 0.0, 128
        %1010 = vxpose.xlu0.b32.cont [7/16] 0.0, 128
        %1011 = vxpose.xlu0.b32.cont [8/16] 0.0, 128
        %1012 = vxpose.xlu0.b32.cont [9/16] 0.0, 128
        %1013 = vxpose.xlu0.b32.cont [10/16] 0.0, 128
        %1014 = vxpose.xlu0.b32.cont [11/16] 0.0, 128
        %1015 = vxpose.xlu0.b32.cont [12/16] 0.0, 128
        %1016 = vxpose.xlu0.b32.cont [13/16] 0.0, 128
        %1017 = vxpose.xlu0.b32.cont [14/16] 0.0, 128
        %1018 = vxpose.xlu0.b32.cont [15/16] 0.0, 128
        %1019 = vxpose.xlu0.b32.end [16/16] 0.0, 128
        %v1020 = vpop.trf.xlu0
        %v1021 = vpop.trf.xlu0
        %v1022 = vpop.trf.xlu0
        %v1023 = vpop.trf.xlu0
        %v1024 = vpop.trf.xlu0
        %v1025 = vpop.trf.xlu0
        %v1026 = vpop.trf.xlu0
        %v1027 = vpop.trf.xlu0
        %v1028 = vpop.trf.xlu0
        %v1029 = vpop.trf.xlu0
        %v1030 = vpop.trf.xlu0
        %v1031 = vpop.trf.xlu0
        %v1032 = vpop.trf.xlu0
        %v1033 = vpop.trf.xlu0
        %v1034 = vpop.trf.xlu0
        %v1035 = vpop.trf.xlu0
        %v1036 = vpack.c.bf16 %v1020, %v1020
        %v1037 = vpack.c.bf16 %v1021, %v1021
        %v1038 = vpack.c.bf16 %v1022, %v1022
        %v1039 = vpack.c.bf16 %v1023, %v1023
        %v1040 = vpack.c.bf16 %v1024, %v1024
        %v1041 = vpack.c.bf16 %v1025, %v1025
        %v1042 = vpack.c.bf16 %v1026, %v1026
        %v1043 = vpack.c.bf16 %v1027, %v1027
        %v1044 = vpack.c.bf16 %v1028, %v1028
        %v1045 = vpack.c.bf16 %v1029, %v1029
        %v1046 = vpack.c.bf16 %v1030, %v1030
        %v1047 = vpack.c.bf16 %v1031, %v1031
        %v1048 = vpack.c.bf16 %v1032, %v1032
        %v1049 = vpack.c.bf16 %v1033, %v1033
        %v1050 = vpack.c.bf16 %v1034, %v1034
        %v1051 = vpack.c.bf16 %v1035, %v1035
        %v1052 = vpack.c.bf16 %v998, %v998
        %v1053 = vpack.c.bf16 %v1000, %v1000
        %v1058 = vunpack.c.l.b16 %v1036
        %v1059 = vunpack.c.l.b16 %v1037
        %v1060 = vunpack.c.l.b16 %v1038
        %v1061 = vunpack.c.l.b16 %v1039
        %v1062 = vpack.c.b16 %v1059, %v1058
        %v1063 = vpack.c.b16 %v1061, %v1060
        %vm1066 = vcmask 261120
        %v1068 = vsel %vm1066, %v1003, 0
        %1070 = vmatpush.bf16.msra.mxu0 0
        %1071 = vmatpush.bf16.msra.mxu0 0
        %1072 = vmatpush.bf16.msra.mxu0 0
        %1073 = vmatpush.bf16.msra.mxu0 0
        %1074 = vmatpush.bf16.msra.mxu0 0
        %1075 = vmatpush.bf16.msra.mxu0 0
        %1076 = vmatpush.bf16.msra.mxu0 %v1063
        %1077 = vmatpush.bf16.msra.mxu0 %v1062
        %1078 = vmatmul.bf16.gmra.mxu0 %v1068
        %v1079 = vpop.f32.mrf.mxu0
        %v1080 = vadd.f32 0.0, %v1079
        %v1081 = vpop.f32.mrf.mxu0
        %1082 = vdwg.mxu0
        %vm1083 = vcmask 130048
        %v1084 = vsel %vm1083, %v1080, -inf
        %1085 = vmax.xlane.f32.xlu0 %v1084
        %v1086 = vpop.xlane.xlu0 %1085
        %v1087 = vsub.f32 %v1080, %v1086
        %v1088 = vmul.f32 %v1087, 1.442695
        %v1089 = vpow.pop %v1088
        %v1090 = vsel %vm1083, %v1089, 0.0
        %1091 = vadd.xlane.f32.xlu0 %v1090
        %v1092 = vpop.xlane.xlu0 %1091
        %v1093 = vrcp.pop %v1092
        %v1094 = vmul.f32 %v1089, %v1093
        %v1095 = vpack.c.bf16 %v1094, %v1094
        %v1098 = vunpack.c.l.b16 %v1052
        %v1099 = vunpack.c.l.b16 %v1053
        %v1100 = vpack.c.b16 %v1099, %v1098
        %v1103 = vsel %vm1083, %v1095, 0
        %1105 = vmatpush.bf16.msra.mxu0 0
        %1106 = vmatpush.bf16.msra.mxu0 0
        %1107 = vmatpush.bf16.msra.mxu0 0
        %1108 = vmatpush.bf16.msra.mxu0 0
        %1109 = vmatpush.bf16.msra.mxu0 0
        %1110 = vmatpush.bf16.msra.mxu0 0
        %1111 = vmatpush.bf16.msra.mxu0 0
        %1112 = vmatpush.bf16.msra.mxu0 %v1100
        %1113 = vmatmul.bf16.gmra.mxu0 %v1103
        %v1114 = vpop.f32.mrf.mxu0
        %v1115 = vadd.f32 0.0, %v1114
        %v1116 = vpop.f32.mrf.mxu0
        %1117 = vdwg.mxu0
        %1118 = vst.msk [vmem:[#allocation2] sm:$0xff] %vm1066, %v1115
        %v1120 = vunpack.c.l.b16 %v1003
        %v1121 = vpack.c.b16 %v1120, %v1120
        %1122 = vrot.lane.b32.xlu0 %v1121, 96
        %v1123 = vpop.permute.xlu0 %1122
        %v1128 = vunpack.c.l.b16 %v1040
        %v1129 = vunpack.c.l.b16 %v1041
        %v1130 = vunpack.c.l.b16 %v1042
        %v1131 = vunpack.c.l.b16 %v1043
        %v1132 = vpack.c.b16 %v1129, %v1128
        %v1133 = vpack.c.b16 %v1131, %v1130
        %v1137 = vsel %vm1066, %v1123, 0
        %1139 = vmatpush.bf16.msra.mxu0 0
        %1140 = vmatpush.bf16.msra.mxu0 0
        %1141 = vmatpush.bf16.msra.mxu0 0
        %1142 = vmatpush.bf16.msra.mxu0 0
        %1143 = vmatpush.bf16.msra.mxu0 0
        %1144 = vmatpush.bf16.msra.mxu0 0
        %1145 = vmatpush.bf16.msra.mxu0 %v1133
        %1146 = vmatpush.bf16.msra.mxu0 %v1132
        %1147 = vmatmul.bf16.gmra.mxu0 %v1137
        %v1148 = vpop.f32.mrf.mxu0
        %v1149 = vadd.f32 0.0, %v1148
        %v1150 = vpop.f32.mrf.mxu0
        %1151 = vdwg.mxu0
        %v1152 = vsel %vm1083, %v1149, -inf
        %1153 = vmax.xlane.f32.xlu0 %v1152
        %v1154 = vpop.xlane.xlu0 %1153
        %v1155 = vsub.f32 %v1149, %v1154
        %v1156 = vmul.f32 %v1155, 1.442695
        %v1157 = vpow.pop %v1156
        %v1158 = vsel %vm1083, %v1157, 0.0
        %1159 = vadd.xlane.f32.xlu0 %v1158
        %v1160 = vpop.xlane.xlu0 %1159
        %v1161 = vrcp.pop %v1160
        %v1162 = vmul.f32 %v1157, %v1161
        %v1163 = vpack.c.bf16 %v1162, %v1162
        %1164 = vrot.lane.b32.xlu0 %v1100, 96
        %v1165 = vpop.permute.xlu0 %1164
        %v1168 = vsel %vm1083, %v1163, 0
        %1170 = vmatpush.bf16.msra.mxu0 0
        %1171 = vmatpush.bf16.msra.mxu0 0
        %1172 = vmatpush.bf16.msra.mxu0 0
        %1173 = vmatpush.bf16.msra.mxu0 0
        %1174 = vmatpush.bf16.msra.mxu0 0
        %1175 = vmatpush.bf16.msra.mxu0 0
        %1176 = vmatpush.bf16.msra.mxu0 0
        %1177 = vmatpush.bf16.msra.mxu0 %v1165
        %1178 = vmatmul.bf16.gmra.mxu0 %v1168
        %v1179 = vpop.f32.mrf.mxu0
        %v1180 = vadd.f32 0.0, %v1179
        %v1181 = vpop.f32.mrf.mxu0
        %1182 = vdwg.mxu0
        %1184 = vrot.lane.b32.xlu0 %v1180, 32
        %v1185 = vpop.permute.xlu0 %1184
        %vm1187 = vcmask 523520
        %1188 = vst.msk [vmem:[#allocation2] sm:$0xff] %vm1187, %v1185
        %1189 = vrot.lane.b32.xlu0 %v1121, 64
        %v1190 = vpop.permute.xlu0 %1189
        %v1195 = vunpack.c.l.b16 %v1044
        %v1196 = vunpack.c.l.b16 %v1045
        %v1197 = vunpack.c.l.b16 %v1046
        %v1198 = vunpack.c.l.b16 %v1047
        %v1199 = vpack.c.b16 %v1196, %v1195
        %v1200 = vpack.c.b16 %v1198, %v1197
        %v1204 = vsel %vm1066, %v1190, 0
        %1206 = vmatpush.bf16.msra.mxu0 0
        %1207 = vmatpush.bf16.msra.mxu0 0
        %1208 = vmatpush.bf16.msra.mxu0 0
        %1209 = vmatpush.bf16.msra.mxu0 0
        %1210 = vmatpush.bf16.msra.mxu0 0
        %1211 = vmatpush.bf16.msra.mxu0 0
        %1212 = vmatpush.bf16.msra.mxu0 %v1200
        %1213 = vmatpush.bf16.msra.mxu0 %v1199
        %1214 = vmatmul.bf16.gmra.mxu0 %v1204
        %v1215 = vpop.f32.mrf.mxu0
        %v1216 = vadd.f32 0.0, %v1215
        %v1217 = vpop.f32.mrf.mxu0
        %1218 = vdwg.mxu0
        %v1219 = vsel %vm1083, %v1216, -inf
        %1220 = vmax.xlane.f32.xlu0 %v1219
        %v1221 = vpop.xlane.xlu0 %1220
        %v1222 = vsub.f32 %v1216, %v1221
        %v1223 = vmul.f32 %v1222, 1.442695
        %v1224 = vpow.pop %v1223
        %v1225 = vsel %vm1083, %v1224, 0.0
        %1226 = vadd.xlane.f32.xlu0 %v1225
        %v1227 = vpop.xlane.xlu0 %1226
        %v1228 = vrcp.pop %v1227
        %v1229 = vmul.f32 %v1224, %v1228
        %v1230 = vpack.c.bf16 %v1229, %v1229
        %1231 = vrot.lane.b32.xlu0 %v1100, 64
        %v1232 = vpop.permute.xlu0 %1231
        %v1235 = vsel %vm1083, %v1230, 0
        %1237 = vmatpush.bf16.msra.mxu0 0
        %1238 = vmatpush.bf16.msra.mxu0 0
        %1239 = vmatpush.bf16.msra.mxu0 0
        %1240 = vmatpush.bf16.msra.mxu0 0
        %1241 = vmatpush.bf16.msra.mxu0 0
        %1242 = vmatpush.bf16.msra.mxu0 0
        %1243 = vmatpush.bf16.msra.mxu0 0
        %1244 = vmatpush.bf16.msra.mxu0 %v1232
        %1245 = vmatmul.bf16.gmra.mxu0 %v1235
        %v1246 = vpop.f32.mrf.mxu0
        %v1247 = vadd.f32 0.0, %v1246
        %v1248 = vpop.f32.mrf.mxu0
        %1249 = vdwg.mxu0
        %1251 = vrot.lane.b32.xlu0 %v1247, 64
        %v1252 = vpop.permute.xlu0 %1251
        %vm1254 = vcmask 785920
        %1255 = vst.msk [vmem:[#allocation2] sm:$0xff] %vm1254, %v1252
        %1256 = vrot.lane.b32.xlu0 %v1121, 32
        %v1257 = vpop.permute.xlu0 %1256
        %v1262 = vunpack.c.l.b16 %v1048
        %v1263 = vunpack.c.l.b16 %v1049
        %v1264 = vunpack.c.l.b16 %v1050
        %v1265 = vunpack.c.l.b16 %v1051
        %v1266 = vpack.c.b16 %v1263, %v1262
        %v1267 = vpack.c.b16 %v1265, %v1264
        %v1271 = vsel %vm1066, %v1257, 0
        %1273 = vmatpush.bf16.msra.mxu0 0
        %1274 = vmatpush.bf16.msra.mxu0 0
        %1275 = vmatpush.bf16.msra.mxu0 0
        %1276 = vmatpush.bf16.msra.mxu0 0
        %1277 = vmatpush.bf16.msra.mxu0 0
        %1278 = vmatpush.bf16.msra.mxu0 0
        %1279 = vmatpush.bf16.msra.mxu0 %v1267
        %1280 = vmatpush.bf16.msra.mxu0 %v1266
        %1281 = vmatmul.bf16.gmra.mxu0 %v1271
        %v1282 = vpop.f32.mrf.mxu0
        %v1283 = vadd.f32 0.0, %v1282
        %v1284 = vpop.f32.mrf.mxu0
        %1285 = vdwg.mxu0
        %v1286 = vsel %vm1083, %v1283, -inf
        %1287 = vmax.xlane.f32.xlu0 %v1286
        %v1288 = vpop.xlane.xlu0 %1287
        %v1289 = vsub.f32 %v1283, %v1288
        %v1290 = vmul.f32 %v1289, 1.442695
        %v1291 = vpow.pop %v1290
        %v1292 = vsel %vm1083, %v1291, 0.0
        %1293 = vadd.xlane.f32.xlu0 %v1292
        %v1294 = vpop.xlane.xlu0 %1293
        %v1295 = vrcp.pop %v1294
        %v1296 = vmul.f32 %v1291, %v1295
        %v1297 = vpack.c.bf16 %v1296, %v1296
        %1298 = vrot.lane.b32.xlu0 %v1100, 32
        %v1299 = vpop.permute.xlu0 %1298
        %v1302 = vsel %vm1083, %v1297, 0
        %1304 = vmatpush.bf16.msra.mxu0 0
        %1305 = vmatpush.bf16.msra.mxu0 0
        %1306 = vmatpush.bf16.msra.mxu0 0
        %1307 = vmatpush.bf16.msra.mxu0 0
        %1308 = vmatpush.bf16.msra.mxu0 0
        %1309 = vmatpush.bf16.msra.mxu0 0
        %1310 = vmatpush.bf16.msra.mxu0 0
        %1311 = vmatpush.bf16.msra.mxu0 %v1299
        %1312 = vmatmul.bf16.gmra.mxu0 %v1302
        %v1313 = vpop.f32.mrf.mxu0
        %v1314 = vadd.f32 0.0, %v1313
        %v1315 = vpop.f32.mrf.mxu0
        %1316 = vdwg.mxu0
        %1318 = vrot.lane.b32.xlu0 %v1314, 96
        %v1319 = vpop.permute.xlu0 %1318
        %vm1321 = vcmask 1048320
        %1322 = vst.msk [vmem:[#allocation2] sm:$0xff] %vm1321, %v1319
        %v1323 = vld [vmem:[#allocation2] sm:$0xff]
        %v1324 = vpack.c.bf16 %v1323, %v1323
        %v1325 = vld [vmem:[#allocation12] sm:$0xf]
        %v1326 = vld [vmem:[#allocation12 + $0x4] sm:$0xf]
        %v1327 = vld [vmem:[#allocation12 + $0x8] sm:$0xf]
        %v1328 = vld [vmem:[#allocation12 + $0xc] sm:$0xf]
        %v1329 = vld [vmem:[#allocation12 + $0x10] sm:$0xf]
        %v1330 = vld [vmem:[#allocation12 + $0x14] sm:$0xf]
        %v1331 = vld [vmem:[#allocation12 + $0x18] sm:$0xf]
        %v1332 = vld [vmem:[#allocation12 + $0x1c] sm:$0xf]
        %v1333 = vld [vmem:[#allocation12 + $0x20] sm:$0xf]
        %v1334 = vld [vmem:[#allocation12 + $0x24] sm:$0xf]
        %v1335 = vld [vmem:[#allocation12 + $0x28] sm:$0xf]
        %v1336 = vld [vmem:[#allocation12 + $0x2c] sm:$0xf]
        %v1337 = vld [vmem:[#allocation12 + $0x30] sm:$0xf]
        %v1338 = vld [vmem:[#allocation12 + $0x34] sm:$0xf]
        %v1339 = vld [vmem:[#allocation12 + $0x38] sm:$0xf]
        %v1340 = vld [vmem:[#allocation12 + $0x3c] sm:$0xf]
        %v1341 = vld [vmem:[%s9] sm:$0x1]
        %v1343 = vperm.slane %v1341, 0
        %v1361 = vunpack.c.l.b16 %v1325
        %v1362 = vunpack.c.l.b16 %v1326
        %v1363 = vunpack.c.l.b16 %v1327
        %v1364 = vunpack.c.l.b16 %v1328
        %v1365 = vunpack.c.l.b16 %v1329
        %v1366 = vunpack.c.l.b16 %v1330
        %v1367 = vunpack.c.l.b16 %v1331
        %v1368 = vunpack.c.l.b16 %v1332
        %v1369 = vunpack.c.l.b16 %v1333
        %v1370 = vunpack.c.l.b16 %v1334
        %v1371 = vunpack.c.l.b16 %v1335
        %v1372 = vunpack.c.l.b16 %v1336
        %v1373 = vunpack.c.l.b16 %v1337
        %v1374 = vunpack.c.l.b16 %v1338
        %v1375 = vunpack.c.l.b16 %v1339
        %v1376 = vunpack.c.l.b16 %v1340
        %v1377 = vpack.c.b16 %v1362, %v1361
        %v1378 = vpack.c.b16 %v1364, %v1363
        %v1379 = vpack.c.b16 %v1366, %v1365
        %v1380 = vpack.c.b16 %v1368, %v1367
        %v1381 = vpack.c.b16 %v1370, %v1369
        %v1382 = vpack.c.b16 %v1372, %v1371
        %v1383 = vpack.c.b16 %v1374, %v1373
        %v1384 = vpack.c.b16 %v1376, %v1375
        %1393 = vmatpush.bf16.msra.mxu0 %v1384
        %1394 = vmatpush.bf16.msra.mxu0 %v1383
        %1395 = vmatpush.bf16.msra.mxu0 %v1382
        %1396 = vmatpush.bf16.msra.mxu0 %v1381
        %1397 = vmatpush.bf16.msra.mxu0 %v1380
        %1398 = vmatpush.bf16.msra.mxu0 %v1379
        %1399 = vmatpush.bf16.msra.mxu0 %v1378
        %1400 = vmatpush.bf16.msra.mxu0 %v1377
        %1401 = vmatmul.bf16.gmra.mxu0 %v1324
        %v1402 = vpop.f32.mrf.mxu0
        %v1403 = vadd.f32 %v1343, %v1402
        %v1404 = vpop.f32.mrf.mxu0
        %1405 = vdwg.mxu0
        %v1406 = vadd.f32 %v752, %v1403
        %1407 = vadd.xlane.f32.xlu0 %v1406
        %v1408 = vpop.xlane.xlu0 %1407
        %v1409 = vrcp.pop 128.0
        %v1410 = vmul.f32 128.0, %v1409
        %v1411 = vsub.f32 1.0, %v1410
        %v1412 = vmul.f32 %v1409, %v1411
        %v1413 = vadd.f32 %v1409, %v1412
        %vm1414 = vweird.f32 %v1409
        %v1415 = vsel %vm1414, %v1409, %v1413
        %v1416 = vmul.f32 %v1408, %v1415
        %v1417 = vsub.f32 %v1406, %v1416
        %v1418 = vmul.f32 %v1417, %v1417
        %1419 = vadd.xlane.f32.xlu0 %v1418
        %v1420 = vpop.xlane.xlu0 %1419
        %v1421 = vmul.f32 %v1420, %v1415
        %v1422 = vadd.f32 %v1421, 1e-05
        %v1423 = vrsqrt.pop %v1422
        %v1424 = vmul.f32 %v1423, %v1422
        %v1425 = vmul.f32 %v1424, %v1423
        %v1426 = vmul.f32 0.5, %v1425
        %v1427 = vsub.f32 1.5, %v1426
        %v1428 = vmul.f32 %v1423, %v1427
        %vm1429 = vweird.f32 %v1422
        %vm1430 = vweird.f32 %v1423
        %vm1431 = vmor %vm1429, %vm1430
        %v1432 = vsel %vm1431, %v1423, %v1428
        %v1433 = vmul.f32 %v1417, %v1432
        %v1434 = vld [vmem:[%s10] sm:$0x1]
        %v1436 = vperm.slane %v1434, 0
        %v1438 = vmul.f32 %v1433, %v1436
        %v1439 = vld [vmem:[%s11] sm:$0x1]
        %v1441 = vperm.slane %v1439, 0
        %v1443 = vadd.f32 %v1438, %v1441
        %v1444 = vpack.c.bf16 %v1443, %v1443
        %v1445 = vld [vmem:[#allocation14] sm:$0xff]
        %v1446 = vld [vmem:[#allocation14 + $0x8] sm:$0xff]
        %v1447 = vld [vmem:[#allocation14 + $0x10] sm:$0xff]
        %v1448 = vld [vmem:[#allocation14 + $0x18] sm:$0xff]
        %v1449 = vld [vmem:[#allocation14 + $0x20] sm:$0xff]
        %v1450 = vld [vmem:[#allocation14 + $0x28] sm:$0xff]
        %v1451 = vld [vmem:[#allocation14 + $0x30] sm:$0xff]
        %v1452 = vld [vmem:[#allocation14 + $0x38] sm:$0xff]
        %v1453 = vld [vmem:[#allocation14 + $0x40] sm:$0xff]
        %v1454 = vld [vmem:[#allocation14 + $0x48] sm:$0xff]
        %v1455 = vld [vmem:[#allocation14 + $0x50] sm:$0xff]
        %v1456 = vld [vmem:[#allocation14 + $0x58] sm:$0xff]
        %v1457 = vld [vmem:[#allocation14 + $0x60] sm:$0xff]
        %v1458 = vld [vmem:[#allocation14 + $0x68] sm:$0xff]
        %v1459 = vld [vmem:[#allocation14 + $0x70] sm:$0xff]
        %v1460 = vld [vmem:[#allocation14 + $0x78] sm:$0xff]
        %v1461 = vld [vmem:[%s13] sm:$0x3]
        %v1463 = vperm.slane %v1461, 0
        %v1464 = vperm.slane %v1461, 1
        %v1483 = vunpack.c.l.b16 %v1445
        %v1484 = vunpack.c.h.b16 %v1445
        %v1485 = vunpack.c.l.b16 %v1446
        %v1486 = vunpack.c.h.b16 %v1446
        %v1487 = vunpack.c.l.b16 %v1447
        %v1488 = vunpack.c.h.b16 %v1447
        %v1489 = vunpack.c.l.b16 %v1448
        %v1490 = vunpack.c.h.b16 %v1448
        %v1491 = vunpack.c.l.b16 %v1449
        %v1492 = vunpack.c.h.b16 %v1449
        %v1493 = vunpack.c.l.b16 %v1450
        %v1494 = vunpack.c.h.b16 %v1450
        %v1495 = vunpack.c.l.b16 %v1451
        %v1496 = vunpack.c.h.b16 %v1451
        %v1497 = vunpack.c.l.b16 %v1452
        %v1498 = vunpack.c.h.b16 %v1452
        %v1499 = vunpack.c.l.b16 %v1453
        %v1500 = vunpack.c.h.b16 %v1453
        %v1501 = vunpack.c.l.b16 %v1454
        %v1502 = vunpack.c.h.b16 %v1454
        %v1503 = vunpack.c.l.b16 %v1455
        %v1504 = vunpack.c.h.b16 %v1455
        %v1505 = vunpack.c.l.b16 %v1456
        %v1506 = vunpack.c.h.b16 %v1456
        %v1507 = vunpack.c.l.b16 %v1457
        %v1508 = vunpack.c.h.b16 %v1457
        %v1509 = vunpack.c.l.b16 %v1458
        %v1510 = vunpack.c.h.b16 %v1458
        %v1511 = vunpack.c.l.b16 %v1459
        %v1512 = vunpack.c.h.b16 %v1459
        %v1513 = vunpack.c.l.b16 %v1460
        %v1514 = vunpack.c.h.b16 %v1460
        %v1515 = vpack.c.b16 %v1485, %v1483
        %v1516 = vpack.c.b16 %v1486, %v1484
        %v1517 = vpack.c.b16 %v1489, %v1487
        %v1518 = vpack.c.b16 %v1490, %v1488
        %v1519 = vpack.c.b16 %v1493, %v1491
        %v1520 = vpack.c.b16 %v1494, %v1492
        %v1521 = vpack.c.b16 %v1497, %v1495
        %v1522 = vpack.c.b16 %v1498, %v1496
        %v1523 = vpack.c.b16 %v1501, %v1499
        %v1524 = vpack.c.b16 %v1502, %v1500
        %v1525 = vpack.c.b16 %v1505, %v1503
        %v1526 = vpack.c.b16 %v1506, %v1504
        %v1527 = vpack.c.b16 %v1509, %v1507
        %v1528 = vpack.c.b16 %v1510, %v1508
        %v1529 = vpack.c.b16 %v1513, %v1511
        %v1530 = vpack.c.b16 %v1514, %v1512
        %1547 = vmatpush.bf16.msra.mxu0 %v1529
        %1548 = vmatpush.bf16.msra.mxu0 %v1527
        %1549 = vmatpush.bf16.msra.mxu0 %v1525
        %1550 = vmatpush.bf16.msra.mxu0 %v1523
        %1551 = vmatpush.bf16.msra.mxu0 %v1521
        %1552 = vmatpush.bf16.msra.mxu0 %v1519
        %1553 = vmatpush.bf16.msra.mxu0 %v1517
        %1554 = vmatpush.bf16.msra.mxu0 %v1515
        %1555 = vmatmul.bf16.gmra.mxu0 %v1444
        %v1556 = vpop.f32.mrf.mxu0
        %v1557 = vadd.f32 %v1463, %v1556
        %v1558 = vpop.f32.mrf.mxu0
        %1559 = vdwg.mxu0
        %1560 = vmatpush.bf16.msra.mxu0 %v1530
        %1561 = vmatpush.bf16.msra.mxu0 %v1528
        %1562 = vmatpush.bf16.msra.mxu0 %v1526
        %1563 = vmatpush.bf16.msra.mxu0 %v1524
        %1564 = vmatpush.bf16.msra.mxu0 %v1522
        %1565 = vmatpush.bf16.msra.mxu0 %v1520
        %1566 = vmatpush.bf16.msra.mxu0 %v1518
        %1567 = vmatpush.bf16.msra.mxu0 %v1516
        %1568 = vmatmul.bf16.gmra.mxu0 %v1444
        %v1569 = vpop.f32.mrf.mxu0
        %v1570 = vadd.f32 %v1464, %v1569
        %v1571 = vpop.f32.mrf.mxu0
        %1572 = vdwg.mxu0
        %v1573 = vmax.f32 %v1557, 0.0
        %v1574 = vmax.f32 %v1570, 0.0
        %v1575 = vpack.c.bf16 %v1573, %v1573
        %v1576 = vpack.c.bf16 %v1574, %v1574
        %v1577 = vld [vmem:[#allocation15] sm:$0xf]
        %v1578 = vld [vmem:[#allocation15 + $0x4] sm:$0xf]
        %v1579 = vld [vmem:[#allocation15 + $0x8] sm:$0xf]
        %v1580 = vld [vmem:[#allocation15 + $0xc] sm:$0xf]
        %v1581 = vld [vmem:[#allocation15 + $0x10] sm:$0xf]
        %v1582 = vld [vmem:[#allocation15 + $0x14] sm:$0xf]
        %v1583 = vld [vmem:[#allocation15 + $0x18] sm:$0xf]
        %v1584 = vld [vmem:[#allocation15 + $0x1c] sm:$0xf]
        %v1585 = vld [vmem:[#allocation15 + $0x20] sm:$0xf]
        %v1586 = vld [vmem:[#allocation15 + $0x24] sm:$0xf]
        %v1587 = vld [vmem:[#allocation15 + $0x28] sm:$0xf]
        %v1588 = vld [vmem:[#allocation15 + $0x2c] sm:$0xf]
        %v1589 = vld [vmem:[#allocation15 + $0x30] sm:$0xf]
        %v1590 = vld [vmem:[#allocation15 + $0x34] sm:$0xf]
        %v1591 = vld [vmem:[#allocation15 + $0x38] sm:$0xf]
        %v1592 = vld [vmem:[#allocation15 + $0x3c] sm:$0xf]
        %v1593 = vld [vmem:[#allocation15 + $0x40] sm:$0xf]
        %v1594 = vld [vmem:[#allocation15 + $0x44] sm:$0xf]
        %v1595 = vld [vmem:[#allocation15 + $0x48] sm:$0xf]
        %v1596 = vld [vmem:[#allocation15 + $0x4c] sm:$0xf]
        %v1597 = vld [vmem:[#allocation15 + $0x50] sm:$0xf]
        %v1598 = vld [vmem:[#allocation15 + $0x54] sm:$0xf]
        %v1599 = vld [vmem:[#allocation15 + $0x58] sm:$0xf]
        %v1600 = vld [vmem:[#allocation15 + $0x5c] sm:$0xf]
        %v1601 = vld [vmem:[#allocation15 + $0x60] sm:$0xf]
        %v1602 = vld [vmem:[#allocation15 + $0x64] sm:$0xf]
        %v1603 = vld [vmem:[#allocation15 + $0x68] sm:$0xf]
        %v1604 = vld [vmem:[#allocation15 + $0x6c] sm:$0xf]
        %v1605 = vld [vmem:[#allocation15 + $0x70] sm:$0xf]
        %v1606 = vld [vmem:[#allocation15 + $0x74] sm:$0xf]
        %v1607 = vld [vmem:[#allocation15 + $0x78] sm:$0xf]
        %v1608 = vld [vmem:[#allocation15 + $0x7c] sm:$0xf]
        %v1609 = vld [vmem:[%s15] sm:$0x1]
        %v1611 = vperm.slane %v1609, 0
        %v1645 = vunpack.c.l.b16 %v1577
        %v1646 = vunpack.c.l.b16 %v1578
        %v1647 = vunpack.c.l.b16 %v1579
        %v1648 = vunpack.c.l.b16 %v1580
        %v1649 = vunpack.c.l.b16 %v1581
        %v1650 = vunpack.c.l.b16 %v1582
        %v1651 = vunpack.c.l.b16 %v1583
        %v1652 = vunpack.c.l.b16 %v1584
        %v1653 = vunpack.c.l.b16 %v1585
        %v1654 = vunpack.c.l.b16 %v1586
        %v1655 = vunpack.c.l.b16 %v1587
        %v1656 = vunpack.c.l.b16 %v1588
        %v1657 = vunpack.c.l.b16 %v1589
        %v1658 = vunpack.c.l.b16 %v1590
        %v1659 = vunpack.c.l.b16 %v1591
        %v1660 = vunpack.c.l.b16 %v1592
        %v1661 = vunpack.c.l.b16 %v1593
        %v1662 = vunpack.c.l.b16 %v1594
        %v1663 = vunpack.c.l.b16 %v1595
        %v1664 = vunpack.c.l.b16 %v1596
        %v1665 = vunpack.c.l.b16 %v1597
        %v1666 = vunpack.c.l.b16 %v1598
        %v1667 = vunpack.c.l.b16 %v1599
        %v1668 = vunpack.c.l.b16 %v1600
        %v1669 = vunpack.c.l.b16 %v1601
        %v1670 = vunpack.c.l.b16 %v1602
        %v1671 = vunpack.c.l.b16 %v1603
        %v1672 = vunpack.c.l.b16 %v1604
        %v1673 = vunpack.c.l.b16 %v1605
        %v1674 = vunpack.c.l.b16 %v1606
        %v1675 = vunpack.c.l.b16 %v1607
        %v1676 = vunpack.c.l.b16 %v1608
        %v1677 = vpack.c.b16 %v1646, %v1645
        %v1678 = vpack.c.b16 %v1648, %v1647
        %v1679 = vpack.c.b16 %v1650, %v1649
        %v1680 = vpack.c.b16 %v1652, %v1651
        %v1681 = vpack.c.b16 %v1654, %v1653
        %v1682 = vpack.c.b16 %v1656, %v1655
        %v1683 = vpack.c.b16 %v1658, %v1657
        %v1684 = vpack.c.b16 %v1660, %v1659
        %v1685 = vpack.c.b16 %v1662, %v1661
        %v1686 = vpack.c.b16 %v1664, %v1663
        %v1687 = vpack.c.b16 %v1666, %v1665
        %v1688 = vpack.c.b16 %v1668, %v1667
        %v1689 = vpack.c.b16 %v1670, %v1669
        %v1690 = vpack.c.b16 %v1672, %v1671
        %v1691 = vpack.c.b16 %v1674, %v1673
        %v1692 = vpack.c.b16 %v1676, %v1675
        %1709 = vmatpush.bf16.msra.mxu0 %v1684
        %1710 = vmatpush.bf16.msra.mxu0 %v1683
        %1711 = vmatpush.bf16.msra.mxu0 %v1682
        %1712 = vmatpush.bf16.msra.mxu0 %v1681
        %1713 = vmatpush.bf16.msra.mxu0 %v1680
        %1714 = vmatpush.bf16.msra.mxu0 %v1679
        %1715 = vmatpush.bf16.msra.mxu0 %v1678
        %1716 = vmatpush.bf16.msra.mxu0 %v1677
        %1717 = vmatmul.bf16.gmra.mxu0 %v1575
        %v1718 = vpop.f32.mrf.mxu0
        %v1719 = vadd.f32 %v1611, %v1718
        %v1720 = vpop.f32.mrf.mxu0
        %1721 = vdwg.mxu0
        %1722 = vmatpush.bf16.msra.mxu0 %v1692
        %1723 = vmatpush.bf16.msra.mxu0 %v1691
        %1724 = vmatpush.bf16.msra.mxu0 %v1690
        %1725 = vmatpush.bf16.msra.mxu0 %v1689
        %1726 = vmatpush.bf16.msra.mxu0 %v1688
        %1727 = vmatpush.bf16.msra.mxu0 %v1687
        %1728 = vmatpush.bf16.msra.mxu0 %v1686
        %1729 = vmatpush.bf16.msra.mxu0 %v1685
        %1730 = vmatmul.bf16.gmra.mxu0 %v1576
        %v1731 = vpop.f32.mrf.mxu0
        %v1732 = vadd.f32 %v1719, %v1731
        %v1733 = vpop.f32.mrf.mxu0
        %1734 = vdwg.mxu0
        %v1735 = vadd.f32 %v1443, %v1732
        %1736 = vadd.xlane.f32.xlu0 %v1735
        %v1737 = vpop.xlane.xlu0 %1736
        %v1738 = vmul.f32 %v1737, %v1415
        %v1739 = vsub.f32 %v1735, %v1738
        %v1740 = vmul.f32 %v1739, %v1739
        %1741 = vadd.xlane.f32.xlu0 %v1740
        %v1742 = vpop.xlane.xlu0 %1741
        %v1743 = vmul.f32 %v1742, %v1415
        %v1744 = vadd.f32 %v1743, 1e-05
        %v1745 = vrsqrt.pop %v1744
        %v1746 = vmul.f32 %v1745, %v1744
        %v1747 = vmul.f32 %v1746, %v1745
        %v1748 = vmul.f32 0.5, %v1747
        %v1749 = vsub.f32 1.5, %v1748
        %v1750 = vmul.f32 %v1745, %v1749
        %vm1751 = vweird.f32 %v1744
        %vm1752 = vweird.f32 %v1745
        %vm1753 = vmor %vm1751, %vm1752
        %v1754 = vsel %vm1753, %v1745, %v1750
        %v1755 = vmul.f32 %v1739, %v1754
        %v1756 = vld [vmem:[%s16] sm:$0x1]
        %v1758 = vperm.slane %v1756, 0
        %v1760 = vmul.f32 %v1755, %v1758
        %v1761 = vld [vmem:[%s17] sm:$0x1]
        %v1763 = vperm.slane %v1761, 0
        %v1765 = vadd.f32 %v1760, %v1763
        %1766 = vst [vmem:[%s750] sm:$0xff] %v1765
        %s1767 = sand.u32 %s453, 1
        %s1768 = scalar_lea.sflag [#allocation5], %s1767
        %s1769 = sand.u32 %s453, 1
        %s1770 = smul.addr %s1769, 8
        %s1771 = scalar_lea.vmem [#allocation17], %s1770
        // Predicated region
        $region125: #{tpu_custom_call.1} parent=91 // pred_check
          %p1772 = pneg %p463
        $region126: #{tpu_custom_call.1} parent=91 // pred_check_branch
          %1774 = sbr.rel (%p1772) target = $region128
        $region127: #{tpu_custom_call.1} parent=91 // pred_region
          %1776 = vsyncadd %s1768, 0
          %s1777 = sadd.s32 %s46, %s45
          %s1778 = smul.addr %s1777, 8
          %s1779 = scalar_lea.hbm %s18, %s1778
          %s1781 = sshll.u32 %s1771, 4
          %s1782 = int_to_ptr.vmem [resolvable:$true] %s1781
          %s1783 = sshll.u32 %s1779, 4
          %s1784 = int_to_ptr.hbm [resolvable:$true] %s1783
          %1786 = dma.vmem_to_hbm [thread:$0]  %s1782, 128, %s1784, %s1768
        $region128: #{tpu_custom_call.1} parent=91 // pred_fallthru
          _
      $region92: #{tpu_custom_call.1} parent=5 // pred_fallthru
        _
      %p1787 = scmp.le.s32.totalorder 2, %s36
      // Predicated region
      $region129: #{tpu_custom_call.1} parent=5 // pred_check
        %p1788 = pneg %p1787
      $region130: #{tpu_custom_call.1} parent=5 // pred_check_branch
        %1790 = sbr.rel (%p1788) target = $region132
      $region131: #{tpu_custom_call.1} parent=5 // pred_region
        %s1791 = ssub.s32 %s36, 2
        // Predicated region
        $region133: #{tpu_custom_call.1} parent=131 // pred_check
          %p1792 = pneg %p469
        $region134: #{tpu_custom_call.1} parent=131 // pred_check_branch
          %1794 = sbr.rel (%p1792) target = $region136
        $region135: #{tpu_custom_call.1} parent=131 // pred_region
          %s1795 = sand.u32 %s454, 1
          %s1796 = scalar_lea.sflag [#allocation5], %s1795
          %s1797 = sand.u32 %s454, 1
          %s1798 = smul.addr %s1797, 8
          %s1799 = scalar_lea.vmem [#allocation17], %s1798
          %1801 = dma.done %s1796, 128
        $region136: #{tpu_custom_call.1} parent=131 // pred_fallthru
          _
      $region132: #{tpu_custom_call.1} parent=5 // pred_fallthru
        _
    $region6: #{tpu_custom_call.1} parent=1 // loop_footer
      %s40 = sadd.s32 1, %s36
    $region7: #{tpu_custom_call.1} parent=1 // loop_footer_branch
      %35 = sbr.rel target = $region3
    $region8: #{tpu_custom_call.1} parent=1 // loop_exit
      _
    %1802 = vsyncpa [#allocation4], 1
    %s1803 = scalar_lea.sflag [#allocation4], 1
    %1804 = vsyncpa %s1803, 1
    %1805 = vsyncpa [#allocation7], 1
    %s1806 = scalar_lea.sflag [#allocation7], 1
    %1807 = vsyncpa %s1806, 1
    %1808 = vsyncpa [#allocation10], 1
    %1809 = vsyncpa [#allocation13], 1
    %1810 = vsyncpa [#allocation16], 1
    %1811 = vsyncpa [#allocation5], 1
    %s1812 = scalar_lea.sflag [#allocation5], 1
    %1813 = vsyncpa %s1812, 1

</llo_original>
